<compile_context>
chip_gen: v6e
topology: v6e:2x2x1
jax: 0.10.0
libtpu: 0.0.40
codegen_flags: <defaults>
</compile_context>

<pallas_src>
import functools

import jax
import jax.numpy as jnp
from jax import lax
from jax.experimental import pallas as pl
from jax.experimental.pallas import tpu as pltpu


def _relu6(v):
    return jnp.minimum(jnp.maximum(v, 0.0), 6.0)


_TAPS = tuple((dy, dx) for dy in range(3) for dx in range(3))


def _bottleneck_kernel(x_ref, w1_ref, b1_ref, dw_ref, bdw_ref, w2_ref, b2_ref,
                       o_ref, scr_ref, *, H, W, stride, row_tile, do_residual,
                       bottom_pad, matmul_dtype):
    """One (image, output-row-tile) grid step. All steps are uniform.

    x_ref   : (H*W, Cin)          flattened NHWC image (f32)
    w1_ref  : (Cin, Cmid)         1x1 expansion weight, BN1 scale folded (matmul dtype)
    b1_ref  : (1, Cmid)           BN1 bias (f32)
    dw_ref  : (9, Cmid)           depthwise taps (dy*3+dx), BN_dw scale folded (f32)
    bdw_ref : (1, Cmid)           BN_dw bias (f32)
    w2_ref  : (Cmid, Cout_pad)    1x1 projection weight, BN2 scale folded (matmul dtype)
    b2_ref  : (1, Cout_pad)       BN2 bias (f32, zero in padded lanes)
    o_ref   : (row_tile*Wout, Cout_pad)
    scr_ref : (n_pad_rows+2, W+2, Cmid) per-tile zero-padded halo scratch (f32)
              scratch row s holds padded-input row (ph0 + s - 1).
    """
    r = pl.program_id(1)
    Cin = x_ref.shape[1]
    Cmid = w1_ref.shape[1]
    Cout_pad = o_ref.shape[1]
    Wout = (W + 2 - 3) // stride + 1
    THo = row_tile
    n_pad_rows = (THo - 1) * stride + 3        # padded-input rows this tile reads

    # ---- stage 1: 1x1 expansion + bias + ReLU6 for this tile's halo rows ----
    ph0 = r * (THo * stride)                               # first padded row needed
    read_start = jnp.clip(ph0 - 1, 0, H - n_pad_rows)      # first real input row read
    xstart = read_start * W
    if W % 8 == 0:
        xstart = pl.multiple_of(xstart, 8)
    xa = x_ref[pl.ds(xstart, n_pad_rows * W), :].astype(matmul_dtype)
    h = jnp.dot(xa, w1_ref[...], preferred_element_type=jnp.float32)
    # NOTE: when W % 8 != 0 this reshape is a sublane relayout (7x7/14x14 maps).
    h = _relu6(h + b1_ref[...]).reshape(n_pad_rows, W, Cmid)

    # Zero the 1-pixel left/right border every step (cheap, megacore/pipeline safe).
    zcol = jnp.zeros((n_pad_rows + 2, 1, Cmid), jnp.float32)
    scr_ref[:, 0:1, :] = zcol
    scr_ref[:, W + 1:W + 2, :] = zcol

    # Top / bottom zero-pad rows only at the image boundary tiles.
    @pl.when(r == 0)
    def _():
        scr_ref[1:2, :, :] = jnp.zeros((1, W + 2, Cmid), jnp.float32)

    if bottom_pad:
        @pl.when(r == pl.num_programs(1) - 1)
        def _():
            scr_ref[n_pad_rows:n_pad_rows + 1, :, :] = jnp.zeros(
                (1, W + 2, Cmid), jnp.float32)

    woff = read_start + 2 - ph0                # in {0, 1, 2}
    scr_ref[pl.ds(woff, n_pad_rows), 1:W + 1, :] = h

    # ---- stage 2: depthwise 3x3 + bias + ReLU6 (9 ref-sliced taps) ----
    def tap(k):
        dy, dx = _TAPS[k]
        if stride == 1:
            t = scr_ref[1 + dy:1 + dy + THo, dx:dx + Wout, :]
        else:
            # Strided ref loads instead of an in-register ::stride gather.
            t = scr_ref[pl.ds(1 + dy, THo, stride=stride),
                        pl.ds(dx, Wout, stride=stride), :]
        return t * dw_ref[k]                    # (THo, Wout, Cmid) * (Cmid,)

    acc = tap(0)                                # first tap initializes the accumulator
    for k in range(1, 9):
        acc = acc + tap(k)
    acc = _relu6(acc + bdw_ref[...])

    # ---- stage 3: 1x1 projection + bias (no activation), optional residual ----
    M = THo * Wout
    # NOTE: when Wout % 8 != 0 this reshape is a sublane relayout.
    # TODO(synk): chunk Cmid into 128-lane slabs for very wide expansions (576/960).
    y = jnp.dot(acc.reshape(M, Cmid).astype(matmul_dtype), w2_ref[...],
                preferred_element_type=jnp.float32)
    y = y + b2_ref[...]

    if do_residual:
        # Residual only when stride == 1 and Cin == Cout, so Wout == W and the
        # output rows of this tile map 1:1 onto input rows.
        rs = r * M
        if M % 8 == 0:
            rs = pl.multiple_of(rs, 8)
        res = x_ref[pl.ds(rs, M), :]                       # (M, Cin) f32, exact
        if Cout_pad > Cin:
            res = jnp.concatenate(
                [res, jnp.zeros((M, Cout_pad - Cin), jnp.float32)], axis=-1)
        y = y + res

    o_ref[...] = y                                         # lane-dense (Cout_pad) store


def _fold_bn(gamma, beta, mean, var, eps):
    scale = gamma / jnp.sqrt(var + eps)
    bias = beta - mean * scale
    return scale, bias


def _pick_row_tile(Hout, Wout, Cmid, H, stride):
    """Largest divisor of Hout whose halo fits in H and whose depthwise
    accumulator (row_tile*Wout*Cmid f32) stays ~register resident."""
    for cand in range(Hout, 0, -1):
        if Hout % cand:
            continue
        if (cand - 1) * stride + 3 > H:
            continue
        if (cand * Wout) % 8 != 0 and cand != Hout:
            continue                       # keep the output block sublane-aligned
        if cand * Wout * Cmid <= 32 * 1024:
            return cand
    # Nothing fits the vreg budget / alignment: smallest halo-feasible tile.
    # TODO(synk): 7x7 stages may want block padding / masked stores here.
    for cand in range(1, Hout + 1):
        if Hout % cand == 0 and (cand - 1) * stride + 3 <= H:
            return cand
    raise ValueError("no feasible row_tile for this (H, stride)")


def linear_bottleneck(x_nchw, params, *, stride, matmul_dtype=jnp.bfloat16,
                      row_tile=None, eps=1e-5):
    """Pallas forward of BLSeg LinearBottleneck (inference-mode BatchNorm).

    x_nchw : (N, Cin, H, W) float32
    params : dict of PyTorch-shaped tensors:
      conv1_w (Cmid, Cin, 1, 1), bn1 = (gamma, beta, mean, var) each (Cmid,)
      dw_w    (Cmid, 1, 3, 3),   bn_dw = (...)
      conv2_w (Cout, Cmid, 1, 1), bn2 = (gamma, beta, mean, var) each (Cout,)
    matmul_dtype: jnp.bfloat16 (default, MXU-native on all generations; f32
      accumulate / biases) or jnp.float32 for exact results.
    """
    N, Cin, H, W = x_nchw.shape
    Cmid = params["conv1_w"].shape[0]
    Cout = params["conv2_w"].shape[0]
    Hout = (H + 2 - 3) // stride + 1
    Wout = (W + 2 - 3) // stride + 1
    do_residual = (Cin == Cout) and (stride == 1)

    # Lane-dense output stores: pad narrow Cout to 128 with zero weight/bias
    # columns (extra MXU columns are ~free; wrapper slices them back off).
    Cout_pad = 128 if Cout < 128 else Cout

    # --- host-side param prep: BN folding + layout + matmul-dtype pre-cast ---
    s1, b1v = _fold_bn(*params["bn1"], eps)
    sdw, bdwv = _fold_bn(*params["bn_dw"], eps)
    s2, b2v = _fold_bn(*params["bn2"], eps)

    w1 = (jnp.transpose(params["conv1_w"][:, :, 0, 0]) * s1[None, :]
          ).astype(matmul_dtype)                                         # (Cin, Cmid)
    dw = (jnp.transpose(params["dw_w"][:, 0], (1, 2, 0)) * sdw[None, None, :]
          ).reshape(9, Cmid).astype(jnp.float32)                         # (9, Cmid)
    w2 = jnp.transpose(params["conv2_w"][:, :, 0, 0]) * s2[None, :]      # (Cmid, Cout)
    if Cout_pad != Cout:
        w2 = jnp.pad(w2, ((0, 0), (0, Cout_pad - Cout)))
        b2v = jnp.pad(b2v, (0, Cout_pad - Cout))
    w2 = w2.astype(matmul_dtype)
    b1 = b1v[None, :].astype(jnp.float32)
    bdw = bdwv[None, :].astype(jnp.float32)
    b2 = b2v[None, :].astype(jnp.float32)

    # NCHW -> flattened NHWC (N, H*W, C): channels on the TPU lane axis.
    # x stays f32 (exact residual path); only the expansion matmul casts it.
    x = jnp.transpose(x_nchw, (0, 2, 3, 1)).reshape(N, H * W, Cin).astype(jnp.float32)

    if row_tile is None:
        row_tile = _pick_row_tile(Hout, Wout, Cmid, H, stride)
    n_pad_rows = (row_tile - 1) * stride + 3
    assert Hout % row_tile == 0, (Hout, row_tile)
    assert n_pad_rows <= H, ("row_tile halo does not fit the image", row_tile, H)
    n_row_tiles = Hout // row_tile
    # Is the bottom zero-pad row ever read by the depthwise conv?
    bottom_pad = ((Hout - 1) * stride + 2) == (H + 1)

    kernel = functools.partial(
        _bottleneck_kernel, H=H, W=W, stride=stride, row_tile=row_tile,
        do_residual=do_residual, bottom_pad=bottom_pad, matmul_dtype=matmul_dtype)

    # VMEM budget from the actual buffers (double-buffered blocks + scratch),
    # with headroom, capped to ~3/4 of this generation's physical VMEM.
    wbytes = jnp.dtype(matmul_dtype).itemsize
    need = (2 * H * W * Cin * 4
            + 2 * (Cin * Cmid + Cmid * Cout_pad) * wbytes
            + 2 * (9 * Cmid + 2 * Cmid + Cout_pad) * 4
            + 2 * row_tile * Wout * Cout_pad * 4
            + (n_pad_rows + 2) * (W + 2) * Cmid * 4)
    try:
        phys = int(pltpu.get_tpu_info().vmem_capacity_bytes)
    except Exception:
        phys = 64 * 1024 * 1024
    vmem_limit = int(min(max(2 * need + (8 << 20), 32 << 20), (phys * 3) // 4))

    out = pl.pallas_call(
        kernel,
        out_shape=jax.ShapeDtypeStruct((N, Hout * Wout, Cout_pad), jnp.float32),
        grid_spec=pltpu.PrefetchScalarGridSpec(
            num_scalar_prefetch=0,
            grid=(N, n_row_tiles),
            in_specs=[
                pl.BlockSpec((None, H * W, Cin), lambda n, r: (n, 0, 0)),
                pl.BlockSpec((Cin, Cmid), lambda n, r: (0, 0)),
                pl.BlockSpec((1, Cmid), lambda n, r: (0, 0)),
                pl.BlockSpec((9, Cmid), lambda n, r: (0, 0)),
                pl.BlockSpec((1, Cmid), lambda n, r: (0, 0)),
                pl.BlockSpec((Cmid, Cout_pad), lambda n, r: (0, 0)),
                pl.BlockSpec((1, Cout_pad), lambda n, r: (0, 0)),
            ],
            out_specs=pl.BlockSpec((None, row_tile * Wout, Cout_pad),
                                   lambda n, r: (n, r, 0)),
            scratch_shapes=[
                pltpu.VMEM((n_pad_rows + 2, W + 2, Cmid), jnp.float32)],
        ),
        compiler_params=pltpu.CompilerParams(
            # Every grid step is self-contained (per-tile halo recompute), so
            # both axes can be split across TensorCores (v7x dual-TC).
            dimension_semantics=("parallel", "parallel"),
            vmem_limit_bytes=vmem_limit,
        ),
    )(x, w1, b1, dw, bdw, w2, b2)

    out = out[:, :, :Cout].reshape(N, Hout, Wout, Cout)
    return jnp.transpose(out, (0, 3, 1, 2))  # back to NCHW


# ----------------------- reference (plain JAX, NCHW, PyTorch weights) ----------
def _reference_nchw(x, params, *, stride, eps=1e-5):
    def bn(v, bnp):
        g, b, m, var = bnp
        inv = g / jnp.sqrt(var + eps)
        return ((v - m[None, :, None, None]) * inv[None, :, None, None]
                + b[None, :, None, None])

    Cin = x.shape[1]
    Cmid = params["conv1_w"].shape[0]
    Cout = params["conv2_w"].shape[0]
    do_residual = (Cin == Cout) and (stride == 1)
    hp = lax.Precision.HIGHEST

    h = lax.conv_general_dilated(x, params["conv1_w"], (1, 1), "VALID",
                                 dimension_numbers=("NCHW", "OIHW", "NCHW"),
                                 precision=hp)
    h = jnp.clip(bn(h, params["bn1"]), 0.0, 6.0)
    d = lax.conv_general_dilated(h, params["dw_w"], (stride, stride),
                                 ((1, 1), (1, 1)),
                                 dimension_numbers=("NCHW", "OIHW", "NCHW"),
                                 feature_group_count=Cmid, precision=hp)
    d = jnp.clip(bn(d, params["bn_dw"]), 0.0, 6.0)
    y = lax.conv_general_dilated(d, params["conv2_w"], (1, 1), "VALID",
                                 dimension_numbers=("NCHW", "OIHW", "NCHW"),
                                 precision=hp)
    y = bn(y, params["bn2"])
    if do_residual:
        y = y + x
    return y


def _make_params(key, Cin, Cout, t):
    Cmid = Cin * t
    ks = jax.random.split(key, 15)

    def bn(k1, k2, k3, k4, C):
        return (1.0 + 0.1 * jax.random.normal(k1, (C,), jnp.float32),
                0.1 * jax.random.normal(k2, (C,), jnp.float32),
                0.1 * jax.random.normal(k3, (C,), jnp.float32),
                jax.random.uniform(k4, (C,), jnp.float32, 0.5, 1.5))

    return {
        "conv1_w": 0.1 * jax.random.normal(ks[0], (Cmid, Cin, 1, 1), jnp.float32),
        "bn1": bn(ks[1], ks[2], ks[3], ks[4], Cmid),
        "dw_w": 0.1 * jax.random.normal(ks[5], (Cmid, 1, 3, 3), jnp.float32),
        "bn_dw": bn(ks[6], ks[7], ks[8], ks[9], Cmid),
        "conv2_w": 0.1 * jax.random.normal(ks[10], (Cout, Cmid, 1, 1), jnp.float32),
        "bn2": bn(ks[11], ks[12], ks[13], ks[14], Cout),
    }


if __name__ == "__main__":
    key = jax.random.PRNGKey(0)
    kx, kp = jax.random.split(key)

    N, H, W = 2, 16, 16
    cases = [
        # (Cin, Cout, t, stride, matmul_dtype, tol)
        (8, 8, 4, 1, jnp.float32, 1e-4),     # residual path, stride 1, exact
        (8, 16, 4, 2, jnp.float32, 1e-4),    # stride 2 (strided taps), exact
        (8, 8, 4, 1, jnp.bfloat16, 3e-2),    # default bf16 MXU path, residual
        (8, 16, 4, 2, jnp.bfloat16, 3e-2),   # default bf16 MXU path, stride 2
    ]
    pkeys = jax.random.split(kp, len(cases))

    for i, (Cin, Cout, t, stride, mdt, tol) in enumerate(cases):
        x = jax.random.normal(jax.random.fold_in(kx, i), (N, Cin, H, W),
                              jnp.float32)
        params = _make_params(pkeys[i], Cin, Cout, t)

        out = linear_bottleneck(x, params, stride=stride, matmul_dtype=mdt)
        out = jax.block_until_ready(out)

        ref = _reference_nchw(x, params, stride=stride)
        Hout = (H + 2 - 3) // stride + 1
        Wout = (W + 2 - 3) // stride + 1
        assert out.shape == (N, Cout, Hout, Wout), out.shape
        max_err = float(jnp.max(jnp.abs(out - ref)))
        assert jnp.allclose(out, ref, rtol=tol, atol=tol), (i, max_err)

    print("KERNEL_OK")
</pallas_src>

<mosaic_0001>
module attributes {stable_mosaic.version = 11 : i64} {
  func.func @_bottleneck_kernel(%arg0: i32, %arg1: i32, %arg2: memref<1x256x8xf32, #tpu.memory_space<vmem>>, %arg3: memref<8x32xf32, #tpu.memory_space<vmem>>, %arg4: memref<1x32xf32, #tpu.memory_space<vmem>>, %arg5: memref<9x32xf32, #tpu.memory_space<vmem>>, %arg6: memref<1x32xf32, #tpu.memory_space<vmem>>, %arg7: memref<32x128xf32, #tpu.memory_space<vmem>>, %arg8: memref<1x128xf32, #tpu.memory_space<vmem>>, %arg9: memref<1x128x128xf32, #tpu.memory_space<vmem>>, %arg10: memref<12x18x32xf32, #tpu.memory_space<vmem>>) attributes {dimension_semantics = [#tpu.dimension_semantics<parallel>, #tpu.dimension_semantics<parallel>], iteration_bounds = array<i64: 2, 2>, scalar_prefetch = 0 : i64, scratch_operands = 1 : i64, tpu.core_type = #tpu.core_type<tc>, window_params = [{transform_indices = @transform_0, window_bounds = array<i64: 1, 256, 8>}, {pipeline_mode = #tpu.pipeline_mode<synchronous>, transform_indices = @transform_1, window_bounds = array<i64: 8, 32>}, {pipeline_mode = #tpu.pipeline_mode<synchronous>, transform_indices = @transform_2, window_bounds = array<i64: 1, 32>}, {pipeline_mode = #tpu.pipeline_mode<synchronous>, transform_indices = @transform_3, window_bounds = array<i64: 9, 32>}, {pipeline_mode = #tpu.pipeline_mode<synchronous>, transform_indices = @transform_4, window_bounds = array<i64: 1, 32>}, {pipeline_mode = #tpu.pipeline_mode<synchronous>, transform_indices = @transform_5, window_bounds = array<i64: 32, 128>}, {pipeline_mode = #tpu.pipeline_mode<synchronous>, transform_indices = @transform_6, window_bounds = array<i64: 1, 128>}, {transform_indices = @transform_7, window_bounds = array<i64: 1, 128, 128>}]} {
    %c8_i32 = arith.constant 8 : i32
    %0 = arith.muli %arg1, %c8_i32 : i32
    %c1_i32 = arith.constant 1 : i32
    %1 = arith.subi %0, %c1_i32 : i32
    %c0_i32 = arith.constant 0 : i32
    %c6_i32 = arith.constant 6 : i32
    %2 = arith.maxsi %c0_i32, %1 : i32
    %3 = arith.minsi %c6_i32, %2 : i32
    %c16_i32 = arith.constant 16 : i32
    %4 = arith.muli %3, %c16_i32 : i32
    %5 = tpu.assume_multiple %4, 8 : i32
    %c0 = arith.constant 0 : index
    %6 = arith.index_cast %5 : i32 to index
    %c0_0 = arith.constant 0 : index
    %7 = vector.load %arg2[%c0, %6, %c0_0] : memref<1x256x8xf32, #tpu.memory_space<vmem>>, vector<1x160x8xf32>
    %8 = vector.shape_cast %7 : vector<1x160x8xf32> to vector<160x8xf32>
    %c0_1 = arith.constant 0 : index
    %c0_2 = arith.constant 0 : index
    %9 = vector.load %arg3[%c0_1, %c0_2] : memref<8x32xf32, #tpu.memory_space<vmem>>, vector<8x32xf32>
    %cst = arith.constant dense<0.000000e+00> : vector<160x32xf32>
    %10 = tpu.matmul %8, %9, %cst {dimension_numbers = #tpu.dot_dimension_numbers<[1], [0], [0], [1], [0, 0, 1, 1], [], []>} : vector<160x8xf32>, vector<8x32xf32>, vector<160x32xf32> -> vector<160x32xf32>
    %c0_3 = arith.constant 0 : index
    %c0_4 = arith.constant 0 : index
    %11 = vector.load %arg4[%c0_3, %c0_4] : memref<1x32xf32, #tpu.memory_space<vmem>>, vector<1x32xf32>
    %12 = vector.broadcast %11 : vector<1x32xf32> to vector<160x32xf32>
    %13 = arith.addf %10, %12 : vector<160x32xf32>
    %cst_5 = arith.constant 0.000000e+00 : f32
    %14 = vector.broadcast %cst_5 : f32 to vector<160x32xf32>
    %15 = arith.maximumf %13, %14 : vector<160x32xf32>
    %cst_6 = arith.constant 6.000000e+00 : f32
    %16 = vector.broadcast %cst_6 : f32 to vector<160x32xf32>
    %17 = arith.minimumf %15, %16 : vector<160x32xf32>
    %18 = vector.shape_cast %17 : vector<160x32xf32> to vector<10x16x32xf32>
    %cst_7 = arith.constant 0.000000e+00 : f32
    %19 = vector.broadcast %cst_7 : f32 to vector<12x1x32xf32>
    %c0_8 = arith.constant 0 : index
    %c0_9 = arith.constant 0 : index
    %c0_10 = arith.constant 0 : index
    %20 = vector.load %arg10[%c0_8, %c0_9, %c0_10] : memref<12x18x32xf32, #tpu.memory_space<vmem>>, vector<12x1x32xf32>
    tpu.vector_store %arg10[%c0_8, %c0_9, %c0_10], %19 {strides = array<i32>} : memref<12x18x32xf32, #tpu.memory_space<vmem>>, vector<12x1x32xf32>,
    %c0_11 = arith.constant 0 : index
    %c17 = arith.constant 17 : index
    %c0_12 = arith.constant 0 : index
    %21 = vector.load %arg10[%c0_11, %c17, %c0_12] : memref<12x18x32xf32, #tpu.memory_space<vmem>>, vector<12x1x32xf32>
    tpu.vector_store %arg10[%c0_11, %c17, %c0_12], %19 {strides = array<i32>} : memref<12x18x32xf32, #tpu.memory_space<vmem>>, vector<12x1x32xf32>,
    %c0_i32_13 = arith.constant 0 : i32
    %22 = arith.cmpi eq, %arg1, %c0_i32_13 : i32
    %23 = arith.extui %22 : i1 to i32
    %c0_i32_14 = arith.constant 0 : i32
    %24 = arith.cmpi ne, %23, %c0_i32_14 : i32
    scf.if %24 {
      %cst_71 = arith.constant 0.000000e+00 : f32
      %119 = vector.broadcast %cst_71 : f32 to vector<1x18x32xf32>
      %c1_72 = arith.constant 1 : index
      %c0_73 = arith.constant 0 : index
      %c0_74 = arith.constant 0 : index
      %120 = vector.load %arg10[%c1_72, %c0_73, %c0_74] : memref<12x18x32xf32, #tpu.memory_space<vmem>>, vector<1x18x32xf32>
      tpu.vector_store %arg10[%c1_72, %c0_73, %c0_74], %119 {strides = array<i32>} : memref<12x18x32xf32, #tpu.memory_space<vmem>>, vector<1x18x32xf32>,
    } else {
    }
    %c1_i32_15 = arith.constant 1 : i32
    %25 = arith.cmpi eq, %arg1, %c1_i32_15 : i32
    %26 = arith.extui %25 : i1 to i32
    %c0_i32_16 = arith.constant 0 : i32
    %27 = arith.cmpi ne, %26, %c0_i32_16 : i32
    scf.if %27 {
      %cst_71 = arith.constant 0.000000e+00 : f32
      %119 = vector.broadcast %cst_71 : f32 to vector<1x18x32xf32>
      %c10 = arith.constant 10 : index
      %c0_72 = arith.constant 0 : index
      %c0_73 = arith.constant 0 : index
      %120 = vector.load %arg10[%c10, %c0_72, %c0_73] : memref<12x18x32xf32, #tpu.memory_space<vmem>>, vector<1x18x32xf32>
      tpu.vector_store %arg10[%c10, %c0_72, %c0_73], %119 {strides = array<i32>} : memref<12x18x32xf32, #tpu.memory_space<vmem>>, vector<1x18x32xf32>,
    } else {
    }
    %c2_i32 = arith.constant 2 : i32
    %28 = arith.addi %3, %c2_i32 : i32
    %29 = arith.subi %28, %0 : i32
    %30 = arith.index_cast %29 : i32 to index
    %c1 = arith.constant 1 : index
    %c0_17 = arith.constant 0 : index
    %31 = vector.load %arg10[%30, %c1, %c0_17] : memref<12x18x32xf32, #tpu.memory_space<vmem>>, vector<10x16x32xf32>
    tpu.vector_store %arg10[%30, %c1, %c0_17], %18 {strides = array<i32>} : memref<12x18x32xf32, #tpu.memory_space<vmem>>, vector<10x16x32xf32>,
    %c1_18 = arith.constant 1 : index
    %c0_19 = arith.constant 0 : index
    %c0_20 = arith.constant 0 : index
    %32 = vector.load %arg10[%c1_18, %c0_19, %c0_20] : memref<12x18x32xf32, #tpu.memory_space<vmem>>, vector<8x16x32xf32>
    %c0_21 = arith.constant 0 : index
    %c0_22 = arith.constant 0 : index
    %33 = vector.load %arg5[%c0_21, %c0_22] : memref<9x32xf32, #tpu.memory_space<vmem>>, vector<1x32xf32>
    %34 = vector.shape_cast %33 : vector<1x32xf32> to vector<32xf32>
    %35 = vector.shape_cast %34 : vector<32xf32> to vector<1x1x32xf32>
    %36 = vector.broadcast %35 : vector<1x1x32xf32> to vector<8x16x32xf32>
    %37 = arith.mulf %32, %36 : vector<8x16x32xf32>
    %c1_23 = arith.constant 1 : index
    %c1_24 = arith.constant 1 : index
    %c0_25 = arith.constant 0 : index
    %38 = vector.load %arg10[%c1_23, %c1_24, %c0_25] : memref<12x18x32xf32, #tpu.memory_space<vmem>>, vector<8x16x32xf32>
    %c1_26 = arith.constant 1 : index
    %c0_27 = arith.constant 0 : index
    %39 = vector.load %arg5[%c1_26, %c0_27] : memref<9x32xf32, #tpu.memory_space<vmem>>, vector<1x32xf32>
    %40 = vector.shape_cast %39 : vector<1x32xf32> to vector<32xf32>
    %41 = vector.shape_cast %40 : vector<32xf32> to vector<1x1x32xf32>
    %42 = vector.broadcast %41 : vector<1x1x32xf32> to vector<8x16x32xf32>
    %43 = arith.mulf %38, %42 : vector<8x16x32xf32>
    %44 = arith.addf %37, %43 : vector<8x16x32xf32>
    %c1_28 = arith.constant 1 : index
    %c2 = arith.constant 2 : index
    %c0_29 = arith.constant 0 : index
    %45 = vector.load %arg10[%c1_28, %c2, %c0_29] : memref<12x18x32xf32, #tpu.memory_space<vmem>>, vector<8x16x32xf32>
    %c2_30 = arith.constant 2 : index
    %c0_31 = arith.constant 0 : index
    %46 = vector.load %arg5[%c2_30, %c0_31] : memref<9x32xf32, #tpu.memory_space<vmem>>, vector<1x32xf32>
    %47 = vector.shape_cast %46 : vector<1x32xf32> to vector<32xf32>
    %48 = vector.shape_cast %47 : vector<32xf32> to vector<1x1x32xf32>
    %49 = vector.broadcast %48 : vector<1x1x32xf32> to vector<8x16x32xf32>
    %50 = arith.mulf %45, %49 : vector<8x16x32xf32>
    %51 = arith.addf %44, %50 : vector<8x16x32xf32>
    %c2_32 = arith.constant 2 : index
    %c0_33 = arith.constant 0 : index
    %c0_34 = arith.constant 0 : index
    %52 = vector.load %arg10[%c2_32, %c0_33, %c0_34] : memref<12x18x32xf32, #tpu.memory_space<vmem>>, vector<8x16x32xf32>
    %c3 = arith.constant 3 : index
    %c0_35 = arith.constant 0 : index
    %53 = vector.load %arg5[%c3, %c0_35] : memref<9x32xf32, #tpu.memory_space<vmem>>, vector<1x32xf32>
    %54 = vector.shape_cast %53 : vector<1x32xf32> to vector<32xf32>
    %55 = vector.shape_cast %54 : vector<32xf32> to vector<1x1x32xf32>
    %56 = vector.broadcast %55 : vector<1x1x32xf32> to vector<8x16x32xf32>
    %57 = arith.mulf %52, %56 : vector<8x16x32xf32>
    %58 = arith.addf %51, %57 : vector<8x16x32xf32>
    %c2_36 = arith.constant 2 : index
    %c1_37 = arith.constant 1 : index
    %c0_38 = arith.constant 0 : index
    %59 = vector.load %arg10[%c2_36, %c1_37, %c0_38] : memref<12x18x32xf32, #tpu.memory_space<vmem>>, vector<8x16x32xf32>
    %c4 = arith.constant 4 : index
    %c0_39 = arith.constant 0 : index
    %60 = vector.load %arg5[%c4, %c0_39] : memref<9x32xf32, #tpu.memory_space<vmem>>, vector<1x32xf32>
    %61 = vector.shape_cast %60 : vector<1x32xf32> to vector<32xf32>
    %62 = vector.shape_cast %61 : vector<32xf32> to vector<1x1x32xf32>
    %63 = vector.broadcast %62 : vector<1x1x32xf32> to vector<8x16x32xf32>
    %64 = arith.mulf %59, %63 : vector<8x16x32xf32>
    %65 = arith.addf %58, %64 : vector<8x16x32xf32>
    %c2_40 = arith.constant 2 : index
    %c2_41 = arith.constant 2 : index
    %c0_42 = arith.constant 0 : index
    %66 = vector.load %arg10[%c2_40, %c2_41, %c0_42] : memref<12x18x32xf32, #tpu.memory_space<vmem>>, vector<8x16x32xf32>
    %c5 = arith.constant 5 : index
    %c0_43 = arith.constant 0 : index
    %67 = vector.load %arg5[%c5, %c0_43] : memref<9x32xf32, #tpu.memory_space<vmem>>, vector<1x32xf32>
    %68 = vector.shape_cast %67 : vector<1x32xf32> to vector<32xf32>
    %69 = vector.shape_cast %68 : vector<32xf32> to vector<1x1x32xf32>
    %70 = vector.broadcast %69 : vector<1x1x32xf32> to vector<8x16x32xf32>
    %71 = arith.mulf %66, %70 : vector<8x16x32xf32>
    %72 = arith.addf %65, %71 : vector<8x16x32xf32>
    %c3_44 = arith.constant 3 : index
    %c0_45 = arith.constant 0 : index
    %c0_46 = arith.constant 0 : index
    %73 = vector.load %arg10[%c3_44, %c0_45, %c0_46] : memref<12x18x32xf32, #tpu.memory_space<vmem>>, vector<8x16x32xf32>
    %c6 = arith.constant 6 : index
    %c0_47 = arith.constant 0 : index
    %74 = vector.load %arg5[%c6, %c0_47] : memref<9x32xf32, #tpu.memory_space<vmem>>, vector<1x32xf32>
    %75 = vector.shape_cast %74 : vector<1x32xf32> to vector<32xf32>
    %76 = vector.shape_cast %75 : vector<32xf32> to vector<1x1x32xf32>
    %77 = vector.broadcast %76 : vector<1x1x32xf32> to vector<8x16x32xf32>
    %78 = arith.mulf %73, %77 : vector<8x16x32xf32>
    %79 = arith.addf %72, %78 : vector<8x16x32xf32>
    %c3_48 = arith.constant 3 : index
    %c1_49 = arith.constant 1 : index
    %c0_50 = arith.constant 0 : index
    %80 = vector.load %arg10[%c3_48, %c1_49, %c0_50] : memref<12x18x32xf32, #tpu.memory_space<vmem>>, vector<8x16x32xf32>
    %c7 = arith.constant 7 : index
    %c0_51 = arith.constant 0 : index
    %81 = vector.load %arg5[%c7, %c0_51] : memref<9x32xf32, #tpu.memory_space<vmem>>, vector<1x32xf32>
    %82 = vector.shape_cast %81 : vector<1x32xf32> to vector<32xf32>
    %83 = vector.shape_cast %82 : vector<32xf32> to vector<1x1x32xf32>
    %84 = vector.broadcast %83 : vector<1x1x32xf32> to vector<8x16x32xf32>
    %85 = arith.mulf %80, %84 : vector<8x16x32xf32>
    %86 = arith.addf %79, %85 : vector<8x16x32xf32>
    %c3_52 = arith.constant 3 : index
    %c2_53 = arith.constant 2 : index
    %c0_54 = arith.constant 0 : index
    %87 = vector.load %arg10[%c3_52, %c2_53, %c0_54] : memref<12x18x32xf32, #tpu.memory_space<vmem>>, vector<8x16x32xf32>
    %c8 = arith.constant 8 : index
    %c0_55 = arith.constant 0 : index
    %88 = vector.load %arg5[%c8, %c0_55] : memref<9x32xf32, #tpu.memory_space<vmem>>, vector<1x32xf32>
    %89 = vector.shape_cast %88 : vector<1x32xf32> to vector<32xf32>
    %90 = vector.shape_cast %89 : vector<32xf32> to vector<1x1x32xf32>
    %91 = vector.broadcast %90 : vector<1x1x32xf32> to vector<8x16x32xf32>
    %92 = arith.mulf %87, %91 : vector<8x16x32xf32>
    %93 = arith.addf %86, %92 : vector<8x16x32xf32>
    %c0_56 = arith.constant 0 : index
    %c0_57 = arith.constant 0 : index
    %94 = vector.load %arg6[%c0_56, %c0_57] : memref<1x32xf32, #tpu.memory_space<vmem>>, vector<1x32xf32>
    %95 = vector.shape_cast %94 : vector<1x32xf32> to vector<1x1x32xf32>
    %96 = vector.broadcast %95 : vector<1x1x32xf32> to vector<8x16x32xf32>
    %97 = arith.addf %93, %96 : vector<8x16x32xf32>
    %cst_58 = arith.constant 0.000000e+00 : f32
    %98 = vector.broadcast %cst_58 : f32 to vector<8x16x32xf32>
    %99 = arith.maximumf %97, %98 : vector<8x16x32xf32>
    %cst_59 = arith.constant 6.000000e+00 : f32
    %100 = vector.broadcast %cst_59 : f32 to vector<8x16x32xf32>
    %101 = arith.minimumf %99, %100 : vector<8x16x32xf32>
    %102 = vector.shape_cast %101 : vector<8x16x32xf32> to vector<128x32xf32>
    %c0_60 = arith.constant 0 : index
    %c0_61 = arith.constant 0 : index
    %103 = vector.load %arg7[%c0_60, %c0_61] : memref<32x128xf32, #tpu.memory_space<vmem>>, vector<32x128xf32>
    %cst_62 = arith.constant dense<0.000000e+00> : vector<128x128xf32>
    %104 = tpu.matmul %102, %103, %cst_62 {dimension_numbers = #tpu.dot_dimension_numbers<[1], [0], [0], [1], [0, 0, 1, 1], [], []>} : vector<128x32xf32>, vector<32x128xf32>, vector<128x128xf32> -> vector<128x128xf32>
    %c0_63 = arith.constant 0 : index
    %c0_64 = arith.constant 0 : index
    %105 = vector.load %arg8[%c0_63, %c0_64] : memref<1x128xf32, #tpu.memory_space<vmem>>, vector<1x128xf32>
    %106 = vector.broadcast %105 : vector<1x128xf32> to vector<128x128xf32>
    %107 = arith.addf %104, %106 : vector<128x128xf32>
    %c128_i32 = arith.constant 128 : i32
    %108 = arith.muli %arg1, %c128_i32 : i32
    %109 = tpu.assume_multiple %108, 8 : i32
    %c0_65 = arith.constant 0 : index
    %110 = arith.index_cast %109 : i32 to index
    %c0_66 = arith.constant 0 : index
    %111 = vector.load %arg2[%c0_65, %110, %c0_66] : memref<1x256x8xf32, #tpu.memory_space<vmem>>, vector<1x128x8xf32>
    %112 = vector.shape_cast %111 : vector<1x128x8xf32> to vector<128x8xf32>
    %cst_67 = arith.constant 0.000000e+00 : f32
    %113 = vector.broadcast %cst_67 : f32 to vector<128x120xf32>
    %114 = tpu.concatenate %112, %113 in 1 : vector<128x8xf32>, vector<128x120xf32> -> vector<128x128xf32>
    %115 = arith.addf %107, %114 : vector<128x128xf32>
    %c0_68 = arith.constant 0 : index
    %c0_69 = arith.constant 0 : index
    %c0_70 = arith.constant 0 : index
    %116 = vector.load %arg9[%c0_68, %c0_69, %c0_70] : memref<1x128x128xf32, #tpu.memory_space<vmem>>, vector<1x128x128xf32>
    %117 = vector.shape_cast %116 : vector<1x128x128xf32> to vector<128x128xf32>
    %118 = vector.shape_cast %115 : vector<128x128xf32> to vector<1x128x128xf32>
    tpu.vector_store %arg9[%c0_68, %c0_69, %c0_70], %118 {strides = array<i32>} : memref<1x128x128xf32, #tpu.memory_space<vmem>>, vector<1x128x128xf32>,
    return
  }
  func.func @transform_0(%arg0: i32, %arg1: i32) -> (i32, i32, i32) {
    %c0_i32 = arith.constant 0 : i32
    %c0_i32_0 = arith.constant 0 : i32
    %c0_i32_1 = arith.constant 0 : i32
    return %arg0, %c0_i32, %c0_i32_0 : i32, i32, i32
  }
  func.func @transform_1(%arg0: i32, %arg1: i32) -> (i32, i32) {
    %c0_i32 = arith.constant 0 : i32
    %c0_i32_0 = arith.constant 0 : i32
    %c0_i32_1 = arith.constant 0 : i32
    return %c0_i32, %c0_i32_0 : i32, i32
  }
  func.func @transform_2(%arg0: i32, %arg1: i32) -> (i32, i32) {
    %c0_i32 = arith.constant 0 : i32
    %c0_i32_0 = arith.constant 0 : i32
    %c0_i32_1 = arith.constant 0 : i32
    return %c0_i32, %c0_i32_0 : i32, i32
  }
  func.func @transform_3(%arg0: i32, %arg1: i32) -> (i32, i32) {
    %c0_i32 = arith.constant 0 : i32
    %c0_i32_0 = arith.constant 0 : i32
    %c0_i32_1 = arith.constant 0 : i32
    return %c0_i32, %c0_i32_0 : i32, i32
  }
  func.func @transform_4(%arg0: i32, %arg1: i32) -> (i32, i32) {
    %c0_i32 = arith.constant 0 : i32
    %c0_i32_0 = arith.constant 0 : i32
    %c0_i32_1 = arith.constant 0 : i32
    return %c0_i32, %c0_i32_0 : i32, i32
  }
  func.func @transform_5(%arg0: i32, %arg1: i32) -> (i32, i32) {
    %c0_i32 = arith.constant 0 : i32
    %c0_i32_0 = arith.constant 0 : i32
    %c0_i32_1 = arith.constant 0 : i32
    return %c0_i32, %c0_i32_0 : i32, i32
  }
  func.func @transform_6(%arg0: i32, %arg1: i32) -> (i32, i32) {
    %c0_i32 = arith.constant 0 : i32
    %c0_i32_0 = arith.constant 0 : i32
    %c0_i32_1 = arith.constant 0 : i32
    return %c0_i32, %c0_i32_0 : i32, i32
  }
  func.func @transform_7(%arg0: i32, %arg1: i32) -> (i32, i32, i32) {
    %c0_i32 = arith.constant 0 : i32
    %c0_i32_0 = arith.constant 0 : i32
    return %arg0, %arg1, %c0_i32 : i32, i32, i32
  }
}

</mosaic_0001>

<llo_original>
// kernel: tpu_custom_call.1
$region0: #{tpu_custom_call.1}
  #allocation0 [shape = 'u32[]', space=smem, size = 0x4, offset = 0x4, fixed_abs, tag = 'smem constant byte address 0x4 - core index']
  #allocation1 [shape = 'u32[144,128]{1,0:T(1,128)}', space=vmem, size = 0x12000, scoped, tag = 'internal scratch']
  #allocation2 [shape = 'f32[12,18,32]{2,1,0:T(8,128)}', space=vmem, size = 0x24000, scoped, tag = 'scratch operand']
  %s0 = inlined_call_operand.vmem [shape: f32[2,256,8], index: 0, kind: input, shape index: {}]
  %s1 = inlined_call_operand.vmem [shape: f32[8,32], index: 1, kind: input, shape index: {}]
  %s2 = inlined_call_operand.vmem [shape: f32[1,32], index: 2, kind: input, shape index: {}]
  %s3 = inlined_call_operand.vmem [shape: f32[9,32], index: 3, kind: input, shape index: {}]
  %s4 = inlined_call_operand.vmem [shape: f32[1,32], index: 4, kind: input, shape index: {}]
  %s5 = inlined_call_operand.vmem [shape: f32[32,128], index: 5, kind: input, shape index: {}]
  %s6 = inlined_call_operand.vmem [shape: f32[1,128], index: 6, kind: input, shape index: {}]
  %s7 = inlined_call_operand.hbm [shape: f32[2,256,128], index: 7, kind: output, shape index: {}]
  %s8 = sld [smem:[#allocation0]]
  $region69: #{tpu_custom_call.1} parent=0
    _
  %s10 = ssub.s32 1, %s8
  %s11 = scalar_select 0, %s10, %s8
  $region1: #{tpu_custom_call.1} parent=0
    #allocation3 [shape = 'u8[131072]{0}', space=vmem, size = 0x20000, scoped, tag = 'output window, operand 0']
    #allocation4 [shape = 's32[2]{0}', space=sflag, size = 0x8, scoped, tag = 'scoped memory for tpu_custom_call.1']
    %12 = vsyncpa [#allocation4], 0
    %s13 = scalar_lea.sflag [#allocation4], 1
    %14 = vsyncpa %s13, 0
    loop: start=0, step=1, limit=6
    $region2: #{tpu_custom_call.1} parent=1 // loop_pre_header
      _
    $region3: #{tpu_custom_call.1} parent=1 // loop_header
      %s16 = sphi 0, %s20
      %p17 = scmp.ge.s32.totalorder %s16, 6
      %s23 = sphi 0, %s35
      %s24 = sphi 0, %s31
      %s25 = sphi 0, %s23
      %s26 = sphi 0, %s24
      %s27 = sphi 0, %s25
      %s28 = sphi 0, %s26
      %s38 = sphi 0, %s40
      %s41 = sphi 0, %s38
      %s42 = sphi 0, %s41
      %s58 = sphi 0, %s42
      %s62 = sphi 0, %s62
      %s64 = sphi 0, %s62
      %s65 = sphi 0, %s64
      %s79 = sphi 0, %s65
      %s83 = sphi 0, %s83
      %s85 = sphi 0, %s83
      %s86 = sphi 0, %s85
      %s100 = sphi 0, %s86
      %s104 = sphi 0, %s104
      %s106 = sphi 0, %s104
      %s107 = sphi 0, %s106
      %s121 = sphi 0, %s107
      %s125 = sphi 0, %s125
      %s127 = sphi 0, %s125
      %s128 = sphi 0, %s127
      %s142 = sphi 0, %s128
      %s146 = sphi 0, %s146
      %s148 = sphi 0, %s146
      %s149 = sphi 0, %s148
      %s163 = sphi 0, %s149
      %s167 = sphi 0, %s167
      %s169 = sphi 0, %s167
      %s170 = sphi 0, %s169
      %s184 = sphi 0, %s170
      %s192 = sphi 0, %s194
      %s195 = sphi 0, %s192
      %s196 = sphi 0, %s195
      %s212 = sphi 0, %s196
    $region4: #{tpu_custom_call.1} parent=1 // loop_header_branch
      %19 = sbr.rel (%p17) target = $region8
    $region5: #{tpu_custom_call.1} parent=1 // loop_body
      %s21 = ssub.s32 %s16, 1
      %s22 = ssub.s32 %s16, 2
      %s29 = sadd.s32 1, %s24
      %p30 = scmp.ge.s32.totalorder %s29, 2
      %s31 = scalar_select %p30, 0, %s29
      %s32 = sadd.s32 1, %s23
      %s33 = scalar_select %p30, %s32, %s23
      %p34 = scmp.ge.s32.totalorder %s33, 2
      %s35 = scalar_select %p34, 0, %s33
      %s36 = ssub.s32 %s23, %s35
      %p37 = scmp.eq.s32.totalorder %s36, 0
      %s39 = sadd.s32 %s38, 1
      %s40 = scalar_select %p37, %s38, %s39
      %p43 = pneg %p37
      %p44 = scmp.eq.s32.totalorder %s16, 3
      %p45 = por %p43, %p44
      %p46 = scmp.ne.s32.totalorder %s38, %s41
      %p47 = scmp.eq.s32.totalorder %s16, 0
      %p48 = por %p46, %p47
      %p49 = scmp.ne.s32.totalorder %s38, %s41
      %p50 = scmp.eq.s32.totalorder %s21, 3
      %p51 = por %p49, %p50
      %p52 = scmp.ne.s32.totalorder %s41, %s42
      %p53 = scmp.eq.s32.totalorder %s21, 0
      %p54 = por %p52, %p53
      %p55 = scmp.ne.s32.totalorder %s41, %s42
      %p56 = scmp.eq.s32.totalorder %s22, 3
      %p57 = por %p55, %p56
      %p59 = scmp.ne.s32.totalorder %s42, %s58
      %p60 = scmp.eq.s32.totalorder %s22, 0
      %p61 = por %p59, %p60
      %s63 = sadd.s32 %s62, 1
      %p66 = scmp.eq.s32.totalorder %s16, 3
      %p67 = scmp.ne.s32.totalorder %s62, %s64
      %p68 = scmp.eq.s32.totalorder %s16, 0
      %p69 = por %p67, %p68
      %p70 = scmp.ne.s32.totalorder %s62, %s64
      %p71 = scmp.eq.s32.totalorder %s21, 3
      %p72 = por %p70, %p71
      %p73 = scmp.ne.s32.totalorder %s64, %s65
      %p74 = scmp.eq.s32.totalorder %s21, 0
      %p75 = por %p73, %p74
      %p76 = scmp.ne.s32.totalorder %s64, %s65
      %p77 = scmp.eq.s32.totalorder %s22, 3
      %p78 = por %p76, %p77
      %p80 = scmp.ne.s32.totalorder %s65, %s79
      %p81 = scmp.eq.s32.totalorder %s22, 0
      %p82 = por %p80, %p81
      %s84 = sadd.s32 %s83, 1
      %p87 = scmp.eq.s32.totalorder %s16, 3
      %p88 = scmp.ne.s32.totalorder %s83, %s85
      %p89 = scmp.eq.s32.totalorder %s16, 0
      %p90 = por %p88, %p89
      %p91 = scmp.ne.s32.totalorder %s83, %s85
      %p92 = scmp.eq.s32.totalorder %s21, 3
      %p93 = por %p91, %p92
      %p94 = scmp.ne.s32.totalorder %s85, %s86
      %p95 = scmp.eq.s32.totalorder %s21, 0
      %p96 = por %p94, %p95
      %p97 = scmp.ne.s32.totalorder %s85, %s86
      %p98 = scmp.eq.s32.totalorder %s22, 3
      %p99 = por %p97, %p98
      %p101 = scmp.ne.s32.totalorder %s86, %s100
      %p102 = scmp.eq.s32.totalorder %s22, 0
      %p103 = por %p101, %p102
      %s105 = sadd.s32 %s104, 1
      %p108 = scmp.eq.s32.totalorder %s16, 3
      %p109 = scmp.ne.s32.totalorder %s104, %s106
      %p110 = scmp.eq.s32.totalorder %s16, 0
      %p111 = por %p109, %p110
      %p112 = scmp.ne.s32.totalorder %s104, %s106
      %p113 = scmp.eq.s32.totalorder %s21, 3
      %p114 = por %p112, %p113
      %p115 = scmp.ne.s32.totalorder %s106, %s107
      %p116 = scmp.eq.s32.totalorder %s21, 0
      %p117 = por %p115, %p116
      %p118 = scmp.ne.s32.totalorder %s106, %s107
      %p119 = scmp.eq.s32.totalorder %s22, 3
      %p120 = por %p118, %p119
      %p122 = scmp.ne.s32.totalorder %s107, %s121
      %p123 = scmp.eq.s32.totalorder %s22, 0
      %p124 = por %p122, %p123
      %s126 = sadd.s32 %s125, 1
      %p129 = scmp.eq.s32.totalorder %s16, 3
      %p130 = scmp.ne.s32.totalorder %s125, %s127
      %p131 = scmp.eq.s32.totalorder %s16, 0
      %p132 = por %p130, %p131
      %p133 = scmp.ne.s32.totalorder %s125, %s127
      %p134 = scmp.eq.s32.totalorder %s21, 3
      %p135 = por %p133, %p134
      %p136 = scmp.ne.s32.totalorder %s127, %s128
      %p137 = scmp.eq.s32.totalorder %s21, 0
      %p138 = por %p136, %p137
      %p139 = scmp.ne.s32.totalorder %s127, %s128
      %p140 = scmp.eq.s32.totalorder %s22, 3
      %p141 = por %p139, %p140
      %p143 = scmp.ne.s32.totalorder %s128, %s142
      %p144 = scmp.eq.s32.totalorder %s22, 0
      %p145 = por %p143, %p144
      %s147 = sadd.s32 %s146, 1
      %p150 = scmp.eq.s32.totalorder %s16, 3
      %p151 = scmp.ne.s32.totalorder %s146, %s148
      %p152 = scmp.eq.s32.totalorder %s16, 0
      %p153 = por %p151, %p152
      %p154 = scmp.ne.s32.totalorder %s146, %s148
      %p155 = scmp.eq.s32.totalorder %s21, 3
      %p156 = por %p154, %p155
      %p157 = scmp.ne.s32.totalorder %s148, %s149
      %p158 = scmp.eq.s32.totalorder %s21, 0
      %p159 = por %p157, %p158
      %p160 = scmp.ne.s32.totalorder %s148, %s149
      %p161 = scmp.eq.s32.totalorder %s22, 3
      %p162 = por %p160, %p161
      %p164 = scmp.ne.s32.totalorder %s149, %s163
      %p165 = scmp.eq.s32.totalorder %s22, 0
      %p166 = por %p164, %p165
      %s168 = sadd.s32 %s167, 1
      %p171 = scmp.eq.s32.totalorder %s16, 3
      %p172 = scmp.ne.s32.totalorder %s167, %s169
      %p173 = scmp.eq.s32.totalorder %s16, 0
      %p174 = por %p172, %p173
      %p175 = scmp.ne.s32.totalorder %s167, %s169
      %p176 = scmp.eq.s32.totalorder %s21, 3
      %p177 = por %p175, %p176
      %p178 = scmp.ne.s32.totalorder %s169, %s170
      %p179 = scmp.eq.s32.totalorder %s21, 0
      %p180 = por %p178, %p179
      %p181 = scmp.ne.s32.totalorder %s169, %s170
      %p182 = scmp.eq.s32.totalorder %s22, 3
      %p183 = por %p181, %p182
      %p185 = scmp.ne.s32.totalorder %s170, %s184
      %p186 = scmp.eq.s32.totalorder %s22, 0
      %p187 = por %p185, %p186
      %s188 = ssub.s32 %s23, %s35
      %s189 = ssub.s32 %s24, %s31
      %s190 = sor.u32 %s188, %s189
      %p191 = scmp.eq.s32.totalorder %s190, 0
      %s193 = sadd.s32 %s192, 1
      %s194 = scalar_select %p191, %s192, %s193
      %p197 = pneg %p191
      %p198 = scmp.eq.s32.totalorder %s16, 3
      %p199 = por %p197, %p198
      %p200 = scmp.ne.s32.totalorder %s192, %s195
      %p201 = scmp.eq.s32.totalorder %s16, 0
      %p202 = por %p200, %p201
      %p203 = scmp.ne.s32.totalorder %s192, %s195
      %p204 = scmp.eq.s32.totalorder %s21, 3
      %p205 = por %p203, %p204
      %p206 = scmp.ne.s32.totalorder %s195, %s196
      %p207 = scmp.eq.s32.totalorder %s21, 0
      %p208 = por %p206, %p207
      %p209 = scmp.ne.s32.totalorder %s195, %s196
      %p210 = scmp.eq.s32.totalorder %s22, 3
      %p211 = por %p209, %p210
      %p213 = scmp.ne.s32.totalorder %s196, %s212
      %p214 = scmp.eq.s32.totalorder %s22, 0
      %p215 = por %p213, %p214
      %p216 = scmp.le.s32.totalorder 1, %s16
      %p217 = scmp.lt.s32.totalorder %s16, 5
      %p218 = pnand %p216, %p217
      %p219 = pneg %p218
      // Predicated region
      $region9: #{tpu_custom_call.1} parent=5 // pred_check
        _
      $region10: #{tpu_custom_call.1} parent=5 // pred_check_branch
        %221 = sbr.rel (%p218) target = $region12
      $region11: #{tpu_custom_call.1} parent=5 // pred_region
        %s222 = ssub.s32 %s16, 1
        // Predicated region
        $region13: #{tpu_custom_call.1} parent=11 // pred_check
          %p223 = pneg %p75
        $region14: #{tpu_custom_call.1} parent=11 // pred_check_branch
          %225 = sbr.rel (%p223) target = $region16
        $region15: #{tpu_custom_call.1} parent=11 // pred_region
          _
        $region16: #{tpu_custom_call.1} parent=11 // pred_fallthru
          _
        // Predicated region
        $region17: #{tpu_custom_call.1} parent=11 // pred_check
          %p226 = pneg %p96
        $region18: #{tpu_custom_call.1} parent=11 // pred_check_branch
          %228 = sbr.rel (%p226) target = $region20
        $region19: #{tpu_custom_call.1} parent=11 // pred_region
          _
        $region20: #{tpu_custom_call.1} parent=11 // pred_fallthru
          _
        // Predicated region
        $region21: #{tpu_custom_call.1} parent=11 // pred_check
          %p229 = pneg %p117
        $region22: #{tpu_custom_call.1} parent=11 // pred_check_branch
          %231 = sbr.rel (%p229) target = $region24
        $region23: #{tpu_custom_call.1} parent=11 // pred_region
          _
        $region24: #{tpu_custom_call.1} parent=11 // pred_fallthru
          _
        // Predicated region
        $region25: #{tpu_custom_call.1} parent=11 // pred_check
          %p232 = pneg %p138
        $region26: #{tpu_custom_call.1} parent=11 // pred_check_branch
          %234 = sbr.rel (%p232) target = $region28
        $region27: #{tpu_custom_call.1} parent=11 // pred_region
          _
        $region28: #{tpu_custom_call.1} parent=11 // pred_fallthru
          _
        // Predicated region
        $region29: #{tpu_custom_call.1} parent=11 // pred_check
          %p235 = pneg %p159
        $region30: #{tpu_custom_call.1} parent=11 // pred_check_branch
          %237 = sbr.rel (%p235) target = $region32
        $region31: #{tpu_custom_call.1} parent=11 // pred_region
          _
        $region32: #{tpu_custom_call.1} parent=11 // pred_fallthru
          _
        // Predicated region
        $region33: #{tpu_custom_call.1} parent=11 // pred_check
          %p238 = pneg %p180
        $region34: #{tpu_custom_call.1} parent=11 // pred_check_branch
          %240 = sbr.rel (%p238) target = $region36
        $region35: #{tpu_custom_call.1} parent=11 // pred_region
          _
        $region36: #{tpu_custom_call.1} parent=11 // pred_fallthru
          _
      $region12: #{tpu_custom_call.1} parent=5 // pred_fallthru
        _
      %p241 = scmp.lt.s32.totalorder %s16, 4
      // Predicated region
      $region37: #{tpu_custom_call.1} parent=5 // pred_check
        %p242 = pneg %p241
      $region38: #{tpu_custom_call.1} parent=5 // pred_check_branch
        %244 = sbr.rel (%p242) target = $region40
      $region39: #{tpu_custom_call.1} parent=5 // pred_region
        // Predicated region
        $region41: #{tpu_custom_call.1} parent=39 // pred_check
          %p245 = pneg %p48
        $region42: #{tpu_custom_call.1} parent=39 // pred_check_branch
          %247 = sbr.rel (%p245) target = $region44
        $region43: #{tpu_custom_call.1} parent=39 // pred_region
          %p248 = scmp.lt.s32.totalorder %s23, 1
          %s249 = scalar_select %p248, %s23, 1
          %s250 = smul.addr %s249, 32
          %s251 = smul.addr %s250, 8
          %s252 = scalar_lea.vmem %s0, %s251
        $region44: #{tpu_custom_call.1} parent=39 // pred_fallthru
          _
      $region40: #{tpu_custom_call.1} parent=5 // pred_fallthru
        _
      %p253 = scmp.le.s32.totalorder 1, %s16
      %p254 = scmp.lt.s32.totalorder %s16, 5
      %p255 = pnand %p253, %p254
      %p256 = pneg %p255
      // Predicated region
      $region45: #{tpu_custom_call.1} parent=5 // pred_check
        _
      $region46: #{tpu_custom_call.1} parent=5 // pred_check_branch
        %258 = sbr.rel (%p255) target = $region48
      $region47: #{tpu_custom_call.1} parent=5 // pred_region
        %s259 = ssub.s32 %s16, 1
        %p260 = scmp.lt.s32.totalorder %s25, 1
        %s261 = scalar_select %p260, %s25, 1
        %s262 = smul.addr %s261, 32
        %s263 = smul.addr %s262, 8
        %s264 = scalar_lea.vmem %s0, %s263
        %p265 = pneg %p54
        %p266 = pneg %p51
        %p267 = pneg %p75
        %p268 = pneg %p72
        %p269 = pneg %p96
        %p270 = pneg %p93
        %p271 = pneg %p117
        %p272 = pneg %p114
        %p273 = pneg %p138
        %p274 = pneg %p135
        %p275 = pneg %p159
        %p276 = pneg %p156
        %p277 = pneg %p180
        %p278 = pneg %p177
        %p279 = pneg %p208
        %p280 = pneg %p205
        %s281 = sand.u32 %s195, 1
        %s282 = scalar_lea.sflag [#allocation4], %s281
        %s283 = sand.u32 %s195, 1
        %s284 = smul.addr %s283, 128
        %s285 = scalar_lea.vmem [#allocation3], %s284
        %p286 = scmp.lt.s32.totalorder %s25, 1
        %s287 = scalar_select %p286, %s25, 1
        %s288 = smul.addr %s287, 32
        %s289 = smul.addr %s288, 8
        %s290 = scalar_lea.vmem %s0, %s289
        %s291 = smul.u32 16, %s26
        %s292 = smul.u32 %s26, 8
        %s293 = ssub.s32 %s292, 1
        %p294 = scmp.gt.s32.totalorder %s293, 0
        %s295 = scalar_select %p294, %s293, 0
        %p296 = scmp.lt.s32.totalorder %s295, 6
        %s297 = scalar_select %p296, %s295, 6
        %s298 = smul.u32 %s297, 16
        %s299 = scalar_lea.vmem %s290, %s298
        %v300 = vld [vmem:[%s299] sm:$0xff]
        %v301 = vld [vmem:[%s299 + $0x8] sm:$0xff]
        %v302 = vld [vmem:[%s299 + $0x10] sm:$0xff]
        %v303 = vld [vmem:[%s299 + $0x18] sm:$0xff]
        %v304 = vld [vmem:[%s299 + $0x20] sm:$0xff]
        %v305 = vld [vmem:[%s299 + $0x28] sm:$0xff]
        %v306 = vld [vmem:[%s299 + $0x30] sm:$0xff]
        %v307 = vld [vmem:[%s299 + $0x38] sm:$0xff]
        %v308 = vld [vmem:[%s299 + $0x40] sm:$0xff]
        %v309 = vld [vmem:[%s299 + $0x48] sm:$0xff]
        %v310 = vld [vmem:[%s299 + $0x50] sm:$0xff]
        %v311 = vld [vmem:[%s299 + $0x58] sm:$0xff]
        %v312 = vld [vmem:[%s299 + $0x60] sm:$0xff]
        %v313 = vld [vmem:[%s299 + $0x68] sm:$0xff]
        %v314 = vld [vmem:[%s299 + $0x70] sm:$0xff]
        %v315 = vld [vmem:[%s299 + $0x78] sm:$0xff]
        %v316 = vld [vmem:[%s299 + $0x80] sm:$0xff]
        %v317 = vld [vmem:[%s299 + $0x88] sm:$0xff]
        %v318 = vld [vmem:[%s299 + $0x90] sm:$0xff]
        %v319 = vld [vmem:[%s299 + $0x98] sm:$0xff]
        %v320 = vld [vmem:[%s1] sm:$0xff]
        %v321 = vld [vmem:[%s2] sm:$0x1]
        %v323 = vlaneseq
        %v324 = vshrl.u32 %v323, 7
        %v325 = vsub.s32 0, %v324
        %v326 = vrot.slane %v321, %v325
        %vm328 = vcmask 64512
        %v330 = vsel %vm328, %v300, 0
        %v333 = vsel %vm328, %v301, 0
        %v336 = vsel %vm328, %v302, 0
        %v339 = vsel %vm328, %v303, 0
        %v342 = vsel %vm328, %v304, 0
        %v345 = vsel %vm328, %v305, 0
        %v348 = vsel %vm328, %v306, 0
        %v351 = vsel %vm328, %v307, 0
        %v354 = vsel %vm328, %v308, 0
        %v357 = vsel %vm328, %v309, 0
        %v360 = vsel %vm328, %v310, 0
        %v363 = vsel %vm328, %v311, 0
        %v366 = vsel %vm328, %v312, 0
        %v369 = vsel %vm328, %v313, 0
        %v372 = vsel %vm328, %v314, 0
        %v375 = vsel %vm328, %v315, 0
        %v378 = vsel %vm328, %v316, 0
        %v381 = vsel %vm328, %v317, 0
        %v384 = vsel %vm328, %v318, 0
        %v387 = vsel %vm328, %v319, 0
        %389 = vmatprep.subr.mxu0 0.0
        %390 = vmatpush1.msra.mxu0 0.0
        %391 = vmatprep.subr.mxu0 0.0
        %392 = vmatpush1.msra.mxu0 0.0
        %393 = vmatprep.subr.mxu0 0.0
        %394 = vmatpush1.msra.mxu0 0.0
        %395 = vmatprep.subr.mxu0 0.0
        %396 = vmatpush1.msra.mxu0 0.0
        %397 = vmatprep.subr.mxu0 0.0
        %398 = vmatpush1.msra.mxu0 0.0
        %399 = vmatprep.subr.mxu0 0.0
        %400 = vmatpush1.msra.mxu0 0.0
        %401 = vmatprep.subr.mxu0 0.0
        %402 = vmatpush1.msra.mxu0 0.0
        %403 = vmatprep.subr.mxu0 0.0
        %404 = vmatpush1.msra.mxu0 0.0
        %405 = vmatprep.subr.mxu0 0.0
        %406 = vmatpush1.msra.mxu0 0.0
        %407 = vmatprep.subr.mxu0 0.0
        %408 = vmatpush1.msra.mxu0 0.0
        %409 = vmatprep.subr.mxu0 0.0
        %410 = vmatpush1.msra.mxu0 0.0
        %411 = vmatprep.subr.mxu0 0.0
        %412 = vmatpush1.msra.mxu0 0.0
        %413 = vmatprep.subr.mxu0 0.0
        %414 = vmatpush1.msra.mxu0 0.0
        %415 = vmatprep.subr.mxu0 0.0
        %416 = vmatpush1.msra.mxu0 0.0
        %417 = vmatprep.subr.mxu0 0.0
        %418 = vmatpush1.msra.mxu0 0.0
        %419 = vmatprep.subr.mxu0 0.0
        %420 = vmatpush1.msra.mxu0 %v320
        %421 = vmatprep.subr.mxu0 0.0
        %422 = vmatpush2.msra.mxu0 0.0
        %423 = vmatprep.subr.mxu0 0.0
        %424 = vmatpush2.msra.mxu0 0.0
        %425 = vmatprep.subr.mxu0 0.0
        %426 = vmatpush2.msra.mxu0 0.0
        %427 = vmatprep.subr.mxu0 0.0
        %428 = vmatpush2.msra.mxu0 0.0
        %429 = vmatprep.subr.mxu0 0.0
        %430 = vmatpush2.msra.mxu0 0.0
        %431 = vmatprep.subr.mxu0 0.0
        %432 = vmatpush2.msra.mxu0 0.0
        %433 = vmatprep.subr.mxu0 0.0
        %434 = vmatpush2.msra.mxu0 0.0
        %435 = vmatprep.subr.mxu0 0.0
        %436 = vmatpush2.msra.mxu0 0.0
        %437 = vmatprep.subr.mxu0 0.0
        %438 = vmatpush2.msra.mxu0 0.0
        %439 = vmatprep.subr.mxu0 0.0
        %440 = vmatpush2.msra.mxu0 0.0
        %441 = vmatprep.subr.mxu0 0.0
        %442 = vmatpush2.msra.mxu0 0.0
        %443 = vmatprep.subr.mxu0 0.0
        %444 = vmatpush2.msra.mxu0 0.0
        %445 = vmatprep.subr.mxu0 0.0
        %446 = vmatpush2.msra.mxu0 0.0
        %447 = vmatprep.subr.mxu0 0.0
        %448 = vmatpush2.msra.mxu0 0.0
        %449 = vmatprep.subr.mxu0 0.0
        %450 = vmatpush2.msra.mxu0 0.0
        %451 = vmatprep.subr.mxu0 0.0
        %452 = vmatpush2.msra.mxu0 0.0
        %453 = vmatprep.mubr.f32.mxu0 0.0
        %454 = vmatmul.mubr.f32.gmra.mxu0 %v330
        %v455 = vpop.f32.mrf.mxu0
        %v456 = vadd.f32 %v326, %v455
        %v457 = vpop.f32.mrf.mxu0
        %458 = vmatprep.mubr.f32.mxu0 0.0
        %459 = vmatmul.mubr.f32.gmra.mxu0 %v333
        %v460 = vpop.f32.mrf.mxu0
        %v461 = vadd.f32 %v326, %v460
        %v462 = vpop.f32.mrf.mxu0
        %463 = vmatprep.mubr.f32.mxu0 0.0
        %464 = vmatmul.mubr.f32.gmra.mxu0 %v336
        %v465 = vpop.f32.mrf.mxu0
        %v466 = vadd.f32 %v326, %v465
        %v467 = vpop.f32.mrf.mxu0
        %468 = vmatprep.mubr.f32.mxu0 0.0
        %469 = vmatmul.mubr.f32.gmra.mxu0 %v339
        %v470 = vpop.f32.mrf.mxu0
        %v471 = vadd.f32 %v326, %v470
        %v472 = vpop.f32.mrf.mxu0
        %473 = vmatprep.mubr.f32.mxu0 0.0
        %474 = vmatmul.mubr.f32.gmra.mxu0 %v342
        %v475 = vpop.f32.mrf.mxu0
        %v476 = vadd.f32 %v326, %v475
        %v477 = vpop.f32.mrf.mxu0
        %478 = vmatprep.mubr.f32.mxu0 0.0
        %479 = vmatmul.mubr.f32.gmra.mxu0 %v345
        %v480 = vpop.f32.mrf.mxu0
        %v481 = vadd.f32 %v326, %v480
        %v482 = vpop.f32.mrf.mxu0
        %483 = vmatprep.mubr.f32.mxu0 0.0
        %484 = vmatmul.mubr.f32.gmra.mxu0 %v348
        %v485 = vpop.f32.mrf.mxu0
        %v486 = vadd.f32 %v326, %v485
        %v487 = vpop.f32.mrf.mxu0
        %488 = vmatprep.mubr.f32.mxu0 0.0
        %489 = vmatmul.mubr.f32.gmra.mxu0 %v351
        %v490 = vpop.f32.mrf.mxu0
        %v491 = vadd.f32 %v326, %v490
        %v492 = vpop.f32.mrf.mxu0
        %493 = vmatprep.mubr.f32.mxu0 0.0
        %494 = vmatmul.mubr.f32.gmra.mxu0 %v354
        %v495 = vpop.f32.mrf.mxu0
        %v496 = vadd.f32 %v326, %v495
        %v497 = vpop.f32.mrf.mxu0
        %498 = vmatprep.mubr.f32.mxu0 0.0
        %499 = vmatmul.mubr.f32.gmra.mxu0 %v357
        %v500 = vpop.f32.mrf.mxu0
        %v501 = vadd.f32 %v326, %v500
        %v502 = vpop.f32.mrf.mxu0
        %503 = vmatprep.mubr.f32.mxu0 0.0
        %504 = vmatmul.mubr.f32.gmra.mxu0 %v360
        %v505 = vpop.f32.mrf.mxu0
        %v506 = vadd.f32 %v326, %v505
        %v507 = vpop.f32.mrf.mxu0
        %508 = vmatprep.mubr.f32.mxu0 0.0
        %509 = vmatmul.mubr.f32.gmra.mxu0 %v363
        %v510 = vpop.f32.mrf.mxu0
        %v511 = vadd.f32 %v326, %v510
        %v512 = vpop.f32.mrf.mxu0
        %513 = vmatprep.mubr.f32.mxu0 0.0
        %514 = vmatmul.mubr.f32.gmra.mxu0 %v366
        %v515 = vpop.f32.mrf.mxu0
        %v516 = vadd.f32 %v326, %v515
        %v517 = vpop.f32.mrf.mxu0
        %518 = vmatprep.mubr.f32.mxu0 0.0
        %519 = vmatmul.mubr.f32.gmra.mxu0 %v369
        %v520 = vpop.f32.mrf.mxu0
        %v521 = vadd.f32 %v326, %v520
        %v522 = vpop.f32.mrf.mxu0
        %523 = vmatprep.mubr.f32.mxu0 0.0
        %524 = vmatmul.mubr.f32.gmra.mxu0 %v372
        %v525 = vpop.f32.mrf.mxu0
        %v526 = vadd.f32 %v326, %v525
        %v527 = vpop.f32.mrf.mxu0
        %528 = vmatprep.mubr.f32.mxu0 0.0
        %529 = vmatmul.mubr.f32.gmra.mxu0 %v375
        %v530 = vpop.f32.mrf.mxu0
        %v531 = vadd.f32 %v326, %v530
        %v532 = vpop.f32.mrf.mxu0
        %533 = vmatprep.mubr.f32.mxu0 0.0
        %534 = vmatmul.mubr.f32.gmra.mxu0 %v378
        %v535 = vpop.f32.mrf.mxu0
        %v536 = vadd.f32 %v326, %v535
        %v537 = vpop.f32.mrf.mxu0
        %538 = vmatprep.mubr.f32.mxu0 0.0
        %539 = vmatmul.mubr.f32.gmra.mxu0 %v381
        %v540 = vpop.f32.mrf.mxu0
        %v541 = vadd.f32 %v326, %v540
        %v542 = vpop.f32.mrf.mxu0
        %543 = vmatprep.mubr.f32.mxu0 0.0
        %544 = vmatmul.mubr.f32.gmra.mxu0 %v384
        %v545 = vpop.f32.mrf.mxu0
        %v546 = vadd.f32 %v326, %v545
        %v547 = vpop.f32.mrf.mxu0
        %548 = vmatprep.mubr.f32.mxu0 0.0
        %549 = vmatmul.mubr.f32.gmra.mxu0 %v387
        %v550 = vpop.f32.mrf.mxu0
        %v551 = vadd.f32 %v326, %v550
        %v552 = vpop.f32.mrf.mxu0
        %553 = vdwg.mxu0
        %v554 = vmax.f32 %v456, 0.0
        %v555 = vmax.f32 %v461, 0.0
        %v556 = vmax.f32 %v466, 0.0
        %v557 = vmax.f32 %v471, 0.0
        %v558 = vmax.f32 %v476, 0.0
        %v559 = vmax.f32 %v481, 0.0
        %v560 = vmax.f32 %v486, 0.0
        %v561 = vmax.f32 %v491, 0.0
        %v562 = vmax.f32 %v496, 0.0
        %v563 = vmax.f32 %v501, 0.0
        %v564 = vmax.f32 %v506, 0.0
        %v565 = vmax.f32 %v511, 0.0
        %v566 = vmax.f32 %v516, 0.0
        %v567 = vmax.f32 %v521, 0.0
        %v568 = vmax.f32 %v526, 0.0
        %v569 = vmax.f32 %v531, 0.0
        %v570 = vmax.f32 %v536, 0.0
        %v571 = vmax.f32 %v541, 0.0
        %v572 = vmax.f32 %v546, 0.0
        %v573 = vmax.f32 %v551, 0.0
        %v574 = vmin.f32 %v554, 6.0
        %v575 = vmin.f32 %v555, 6.0
        %v576 = vmin.f32 %v556, 6.0
        %v577 = vmin.f32 %v557, 6.0
        %v578 = vmin.f32 %v558, 6.0
        %v579 = vmin.f32 %v559, 6.0
        %v580 = vmin.f32 %v560, 6.0
        %v581 = vmin.f32 %v561, 6.0
        %v582 = vmin.f32 %v562, 6.0
        %v583 = vmin.f32 %v563, 6.0
        %v584 = vmin.f32 %v564, 6.0
        %v585 = vmin.f32 %v565, 6.0
        %v586 = vmin.f32 %v566, 6.0
        %v587 = vmin.f32 %v567, 6.0
        %v588 = vmin.f32 %v568, 6.0
        %v589 = vmin.f32 %v569, 6.0
        %v590 = vmin.f32 %v570, 6.0
        %v591 = vmin.f32 %v571, 6.0
        %v592 = vmin.f32 %v572, 6.0
        %v593 = vmin.f32 %v573, 6.0
        %vm594 = vcmask 253952
        %595 = vst.msk [vmem:[#allocation2] sm:$0x1] %vm594, 0.0
        %596 = vst.msk [vmem:[#allocation2 + $0x18] sm:$0x1] %vm594, 0.0
        %597 = vst.msk [vmem:[#allocation2 + $0x30] sm:$0x1] %vm594, 0.0
        %598 = vst.msk [vmem:[#allocation2 + $0x48] sm:$0x1] %vm594, 0.0
        %599 = vst.msk [vmem:[#allocation2 + $0x60] sm:$0x1] %vm594, 0.0
        %600 = vst.msk [vmem:[#allocation2 + $0x78] sm:$0x1] %vm594, 0.0
        %601 = vst.msk [vmem:[#allocation2 + $0x90] sm:$0x1] %vm594, 0.0
        %602 = vst.msk [vmem:[#allocation2 + $0xa8] sm:$0x1] %vm594, 0.0
        %603 = vst.msk [vmem:[#allocation2 + $0xc0] sm:$0x1] %vm594, 0.0
        %604 = vst.msk [vmem:[#allocation2 + $0xd8] sm:$0x1] %vm594, 0.0
        %605 = vst.msk [vmem:[#allocation2 + $0xf0] sm:$0x1] %vm594, 0.0
        %606 = vst.msk [vmem:[#allocation2 + $0x108] sm:$0x1] %vm594, 0.0
        %607 = vst.msk [vmem:[#allocation2 + $0x11] sm:$0x1] %vm594, 0.0
        %608 = vst.msk [vmem:[#allocation2 + $0x29] sm:$0x1] %vm594, 0.0
        %609 = vst.msk [vmem:[#allocation2 + $0x41] sm:$0x1] %vm594, 0.0
        %610 = vst.msk [vmem:[#allocation2 + $0x59] sm:$0x1] %vm594, 0.0
        %611 = vst.msk [vmem:[#allocation2 + $0x71] sm:$0x1] %vm594, 0.0
        %612 = vst.msk [vmem:[#allocation2 + $0x89] sm:$0x1] %vm594, 0.0
        %613 = vst.msk [vmem:[#allocation2 + $0xa1] sm:$0x1] %vm594, 0.0
        %614 = vst.msk [vmem:[#allocation2 + $0xb9] sm:$0x1] %vm594, 0.0
        %615 = vst.msk [vmem:[#allocation2 + $0xd1] sm:$0x1] %vm594, 0.0
        %616 = vst.msk [vmem:[#allocation2 + $0xe9] sm:$0x1] %vm594, 0.0
        %617 = vst.msk [vmem:[#allocation2 + $0x101] sm:$0x1] %vm594, 0.0
        %618 = vst.msk [vmem:[#allocation2 + $0x119] sm:$0x1] %vm594, 0.0
        %p619 = scmp.eq.s32.totalorder %s26, 0
        // Predicated region
        $region49: #{tpu_custom_call.1} parent=47 // pred_check
          %p620 = pneg %p619
        $region50: #{tpu_custom_call.1} parent=47 // pred_check_branch
          %622 = sbr.rel (%p620) target = $region52
        $region51: #{tpu_custom_call.1} parent=47 // pred_region
          %s623 = scalar_lea.vmem [#allocation2], 24
          %vm624 = vcmask 261120
          %625 = vst.msk [vmem:[%s623] sm:$0xff] %vm624, 0.0
          %626 = vst.msk [vmem:[%s623 + $0x8] sm:$0xff] %vm624, 0.0
          %vm627 = vcmask 254976
          %628 = vst.msk [vmem:[%s623 + $0x10] sm:$0x3] %vm627, 0.0
        $region52: #{tpu_custom_call.1} parent=47 // pred_fallthru
          _
        %p629 = scmp.eq.s32.totalorder %s26, 1
        // Predicated region
        $region53: #{tpu_custom_call.1} parent=47 // pred_check
          %p630 = pneg %p629
        $region54: #{tpu_custom_call.1} parent=47 // pred_check_branch
          %632 = sbr.rel (%p630) target = $region56
        $region55: #{tpu_custom_call.1} parent=47 // pred_region
          %s633 = scalar_lea.vmem [#allocation2], 240
          %vm634 = vcmask 261120
          %635 = vst.msk [vmem:[%s633] sm:$0xff] %vm634, 0.0
          %636 = vst.msk [vmem:[%s633 + $0x8] sm:$0xff] %vm634, 0.0
          %vm637 = vcmask 254976
          %638 = vst.msk [vmem:[%s633 + $0x10] sm:$0x3] %vm637, 0.0
        $region56: #{tpu_custom_call.1} parent=47 // pred_fallthru
          _
        %s639 = sadd.s32 %s297, 2
        %s640 = ssub.s32 %s639, %s292
        %s641 = smul.u32 %s640, 24
        %s642 = scalar_lea.vmem [#allocation2], %s641
        %vm643 = vcmask 261120
        %644 = vst.msk [vmem:[%s642 + $0x1] sm:$0xff] %vm643, %v574
        %645 = vst.msk [vmem:[%s642 + $0x9] sm:$0xff] %vm643, %v575
        %646 = vst.msk [vmem:[%s642 + $0x19] sm:$0xff] %vm643, %v576
        %647 = vst.msk [vmem:[%s642 + $0x21] sm:$0xff] %vm643, %v577
        %648 = vst.msk [vmem:[%s642 + $0x31] sm:$0xff] %vm643, %v578
        %649 = vst.msk [vmem:[%s642 + $0x39] sm:$0xff] %vm643, %v579
        %650 = vst.msk [vmem:[%s642 + $0x49] sm:$0xff] %vm643, %v580
        %651 = vst.msk [vmem:[%s642 + $0x51] sm:$0xff] %vm643, %v581
        %652 = vst.msk [vmem:[%s642 + $0x61] sm:$0xff] %vm643, %v582
        %653 = vst.msk [vmem:[%s642 + $0x69] sm:$0xff] %vm643, %v583
        %654 = vst.msk [vmem:[%s642 + $0x79] sm:$0xff] %vm643, %v584
        %655 = vst.msk [vmem:[%s642 + $0x81] sm:$0xff] %vm643, %v585
        %656 = vst.msk [vmem:[%s642 + $0x91] sm:$0xff] %vm643, %v586
        %657 = vst.msk [vmem:[%s642 + $0x99] sm:$0xff] %vm643, %v587
        %658 = vst.msk [vmem:[%s642 + $0xa9] sm:$0xff] %vm643, %v588
        %659 = vst.msk [vmem:[%s642 + $0xb1] sm:$0xff] %vm643, %v589
        %660 = vst.msk [vmem:[%s642 + $0xc1] sm:$0xff] %vm643, %v590
        %661 = vst.msk [vmem:[%s642 + $0xc9] sm:$0xff] %vm643, %v591
        %662 = vst.msk [vmem:[%s642 + $0xd9] sm:$0xff] %vm643, %v592
        %663 = vst.msk [vmem:[%s642 + $0xe1] sm:$0xff] %vm643, %v593
        %s664 = scalar_lea.vmem [#allocation2], 24
        %v665 = vld [vmem:[%s664] sm:$0xff]
        %v666 = vld [vmem:[%s664 + $0x8] sm:$0xff]
        %v667 = vld [vmem:[%s664 + $0x18] sm:$0xff]
        %v668 = vld [vmem:[%s664 + $0x20] sm:$0xff]
        %v669 = vld [vmem:[%s664 + $0x30] sm:$0xff]
        %v670 = vld [vmem:[%s664 + $0x38] sm:$0xff]
        %v671 = vld [vmem:[%s664 + $0x48] sm:$0xff]
        %v672 = vld [vmem:[%s664 + $0x50] sm:$0xff]
        %v673 = vld [vmem:[%s664 + $0x60] sm:$0xff]
        %v674 = vld [vmem:[%s664 + $0x68] sm:$0xff]
        %v675 = vld [vmem:[%s664 + $0x78] sm:$0xff]
        %v676 = vld [vmem:[%s664 + $0x80] sm:$0xff]
        %v677 = vld [vmem:[%s664 + $0x90] sm:$0xff]
        %v678 = vld [vmem:[%s664 + $0x98] sm:$0xff]
        %v679 = vld [vmem:[%s664 + $0xa8] sm:$0xff]
        %v680 = vld [vmem:[%s664 + $0xb0] sm:$0xff]
        %v681 = vld [vmem:[%s3] sm:$0x1]
        %v682 = vlaneseq
        %v683 = vshrl.u32 %v682, 7
        %v684 = vsub.s32 0, %v683
        %v685 = vrot.slane %v681, %v684
        %v686 = vmul.f32 %v665, %v685
        %v687 = vmul.f32 %v666, %v685
        %v688 = vmul.f32 %v667, %v685
        %v689 = vmul.f32 %v668, %v685
        %v690 = vmul.f32 %v669, %v685
        %v691 = vmul.f32 %v670, %v685
        %v692 = vmul.f32 %v671, %v685
        %v693 = vmul.f32 %v672, %v685
        %v694 = vmul.f32 %v673, %v685
        %v695 = vmul.f32 %v674, %v685
        %v696 = vmul.f32 %v675, %v685
        %v697 = vmul.f32 %v676, %v685
        %v698 = vmul.f32 %v677, %v685
        %v699 = vmul.f32 %v678, %v685
        %v700 = vmul.f32 %v679, %v685
        %v701 = vmul.f32 %v680, %v685
        %v702 = vld [vmem:[%s664 + $0x1] sm:$0xff]
        %v703 = vld [vmem:[%s664 + $0x9] sm:$0xff]
        %v704 = vld [vmem:[%s664 + $0x19] sm:$0xff]
        %v705 = vld [vmem:[%s664 + $0x21] sm:$0xff]
        %v706 = vld [vmem:[%s664 + $0x31] sm:$0xff]
        %v707 = vld [vmem:[%s664 + $0x39] sm:$0xff]
        %v708 = vld [vmem:[%s664 + $0x49] sm:$0xff]
        %v709 = vld [vmem:[%s664 + $0x51] sm:$0xff]
        %v710 = vld [vmem:[%s664 + $0x61] sm:$0xff]
        %v711 = vld [vmem:[%s664 + $0x69] sm:$0xff]
        %v712 = vld [vmem:[%s664 + $0x79] sm:$0xff]
        %v713 = vld [vmem:[%s664 + $0x81] sm:$0xff]
        %v714 = vld [vmem:[%s664 + $0x91] sm:$0xff]
        %v715 = vld [vmem:[%s664 + $0x99] sm:$0xff]
        %v716 = vld [vmem:[%s664 + $0xa9] sm:$0xff]
        %v717 = vld [vmem:[%s664 + $0xb1] sm:$0xff]
        %v718 = vld [vmem:[%s3 + $0x1] sm:$0x1]
        %v719 = vlaneseq
        %v720 = vshrl.u32 %v719, 7
        %v721 = vsub.s32 0, %v720
        %v722 = vrot.slane %v718, %v721
        %v723 = vmul.f32 %v702, %v722
        %v724 = vmul.f32 %v703, %v722
        %v725 = vmul.f32 %v704, %v722
        %v726 = vmul.f32 %v705, %v722
        %v727 = vmul.f32 %v706, %v722
        %v728 = vmul.f32 %v707, %v722
        %v729 = vmul.f32 %v708, %v722
        %v730 = vmul.f32 %v709, %v722
        %v731 = vmul.f32 %v710, %v722
        %v732 = vmul.f32 %v711, %v722
        %v733 = vmul.f32 %v712, %v722
        %v734 = vmul.f32 %v713, %v722
        %v735 = vmul.f32 %v714, %v722
        %v736 = vmul.f32 %v715, %v722
        %v737 = vmul.f32 %v716, %v722
        %v738 = vmul.f32 %v717, %v722
        %v739 = vadd.f32 %v686, %v723
        %v740 = vadd.f32 %v687, %v724
        %v741 = vadd.f32 %v688, %v725
        %v742 = vadd.f32 %v689, %v726
        %v743 = vadd.f32 %v690, %v727
        %v744 = vadd.f32 %v691, %v728
        %v745 = vadd.f32 %v692, %v729
        %v746 = vadd.f32 %v693, %v730
        %v747 = vadd.f32 %v694, %v731
        %v748 = vadd.f32 %v695, %v732
        %v749 = vadd.f32 %v696, %v733
        %v750 = vadd.f32 %v697, %v734
        %v751 = vadd.f32 %v698, %v735
        %v752 = vadd.f32 %v699, %v736
        %v753 = vadd.f32 %v700, %v737
        %v754 = vadd.f32 %v701, %v738
        %v755 = vld [vmem:[%s664 + $0x2] sm:$0xff]
        %v756 = vld [vmem:[%s664 + $0xa] sm:$0xff]
        %v757 = vld [vmem:[%s664 + $0x1a] sm:$0xff]
        %v758 = vld [vmem:[%s664 + $0x22] sm:$0xff]
        %v759 = vld [vmem:[%s664 + $0x32] sm:$0xff]
        %v760 = vld [vmem:[%s664 + $0x3a] sm:$0xff]
        %v761 = vld [vmem:[%s664 + $0x4a] sm:$0xff]
        %v762 = vld [vmem:[%s664 + $0x52] sm:$0xff]
        %v763 = vld [vmem:[%s664 + $0x62] sm:$0xff]
        %v764 = vld [vmem:[%s664 + $0x6a] sm:$0xff]
        %v765 = vld [vmem:[%s664 + $0x7a] sm:$0xff]
        %v766 = vld [vmem:[%s664 + $0x82] sm:$0xff]
        %v767 = vld [vmem:[%s664 + $0x92] sm:$0xff]
        %v768 = vld [vmem:[%s664 + $0x9a] sm:$0xff]
        %v769 = vld [vmem:[%s664 + $0xaa] sm:$0xff]
        %v770 = vld [vmem:[%s664 + $0xb2] sm:$0xff]
        %v771 = vld [vmem:[%s3 + $0x2] sm:$0x1]
        %v772 = vlaneseq
        %v773 = vshrl.u32 %v772, 7
        %v774 = vsub.s32 0, %v773
        %v775 = vrot.slane %v771, %v774
        %v776 = vmul.f32 %v755, %v775
        %v777 = vmul.f32 %v756, %v775
        %v778 = vmul.f32 %v757, %v775
        %v779 = vmul.f32 %v758, %v775
        %v780 = vmul.f32 %v759, %v775
        %v781 = vmul.f32 %v760, %v775
        %v782 = vmul.f32 %v761, %v775
        %v783 = vmul.f32 %v762, %v775
        %v784 = vmul.f32 %v763, %v775
        %v785 = vmul.f32 %v764, %v775
        %v786 = vmul.f32 %v765, %v775
        %v787 = vmul.f32 %v766, %v775
        %v788 = vmul.f32 %v767, %v775
        %v789 = vmul.f32 %v768, %v775
        %v790 = vmul.f32 %v769, %v775
        %v791 = vmul.f32 %v770, %v775
        %v792 = vadd.f32 %v739, %v776
        %v793 = vadd.f32 %v740, %v777
        %v794 = vadd.f32 %v741, %v778
        %v795 = vadd.f32 %v742, %v779
        %v796 = vadd.f32 %v743, %v780
        %v797 = vadd.f32 %v744, %v781
        %v798 = vadd.f32 %v745, %v782
        %v799 = vadd.f32 %v746, %v783
        %v800 = vadd.f32 %v747, %v784
        %v801 = vadd.f32 %v748, %v785
        %v802 = vadd.f32 %v749, %v786
        %v803 = vadd.f32 %v750, %v787
        %v804 = vadd.f32 %v751, %v788
        %v805 = vadd.f32 %v752, %v789
        %v806 = vadd.f32 %v753, %v790
        %v807 = vadd.f32 %v754, %v791
        %s808 = scalar_lea.vmem [#allocation2], 48
        %v809 = vld [vmem:[%s808] sm:$0xff]
        %v810 = vld [vmem:[%s808 + $0x8] sm:$0xff]
        %v811 = vld [vmem:[%s808 + $0x18] sm:$0xff]
        %v812 = vld [vmem:[%s808 + $0x20] sm:$0xff]
        %v813 = vld [vmem:[%s808 + $0x30] sm:$0xff]
        %v814 = vld [vmem:[%s808 + $0x38] sm:$0xff]
        %v815 = vld [vmem:[%s808 + $0x48] sm:$0xff]
        %v816 = vld [vmem:[%s808 + $0x50] sm:$0xff]
        %v817 = vld [vmem:[%s808 + $0x60] sm:$0xff]
        %v818 = vld [vmem:[%s808 + $0x68] sm:$0xff]
        %v819 = vld [vmem:[%s808 + $0x78] sm:$0xff]
        %v820 = vld [vmem:[%s808 + $0x80] sm:$0xff]
        %v821 = vld [vmem:[%s808 + $0x90] sm:$0xff]
        %v822 = vld [vmem:[%s808 + $0x98] sm:$0xff]
        %v823 = vld [vmem:[%s808 + $0xa8] sm:$0xff]
        %v824 = vld [vmem:[%s808 + $0xb0] sm:$0xff]
        %v825 = vld [vmem:[%s3 + $0x3] sm:$0x1]
        %v826 = vlaneseq
        %v827 = vshrl.u32 %v826, 7
        %v828 = vsub.s32 0, %v827
        %v829 = vrot.slane %v825, %v828
        %v830 = vmul.f32 %v809, %v829
        %v831 = vmul.f32 %v810, %v829
        %v832 = vmul.f32 %v811, %v829
        %v833 = vmul.f32 %v812, %v829
        %v834 = vmul.f32 %v813, %v829
        %v835 = vmul.f32 %v814, %v829
        %v836 = vmul.f32 %v815, %v829
        %v837 = vmul.f32 %v816, %v829
        %v838 = vmul.f32 %v817, %v829
        %v839 = vmul.f32 %v818, %v829
        %v840 = vmul.f32 %v819, %v829
        %v841 = vmul.f32 %v820, %v829
        %v842 = vmul.f32 %v821, %v829
        %v843 = vmul.f32 %v822, %v829
        %v844 = vmul.f32 %v823, %v829
        %v845 = vmul.f32 %v824, %v829
        %v846 = vadd.f32 %v792, %v830
        %v847 = vadd.f32 %v793, %v831
        %v848 = vadd.f32 %v794, %v832
        %v849 = vadd.f32 %v795, %v833
        %v850 = vadd.f32 %v796, %v834
        %v851 = vadd.f32 %v797, %v835
        %v852 = vadd.f32 %v798, %v836
        %v853 = vadd.f32 %v799, %v837
        %v854 = vadd.f32 %v800, %v838
        %v855 = vadd.f32 %v801, %v839
        %v856 = vadd.f32 %v802, %v840
        %v857 = vadd.f32 %v803, %v841
        %v858 = vadd.f32 %v804, %v842
        %v859 = vadd.f32 %v805, %v843
        %v860 = vadd.f32 %v806, %v844
        %v861 = vadd.f32 %v807, %v845
        %v862 = vld [vmem:[%s808 + $0x1] sm:$0xff]
        %v863 = vld [vmem:[%s808 + $0x9] sm:$0xff]
        %v864 = vld [vmem:[%s808 + $0x19] sm:$0xff]
        %v865 = vld [vmem:[%s808 + $0x21] sm:$0xff]
        %v866 = vld [vmem:[%s808 + $0x31] sm:$0xff]
        %v867 = vld [vmem:[%s808 + $0x39] sm:$0xff]
        %v868 = vld [vmem:[%s808 + $0x49] sm:$0xff]
        %v869 = vld [vmem:[%s808 + $0x51] sm:$0xff]
        %v870 = vld [vmem:[%s808 + $0x61] sm:$0xff]
        %v871 = vld [vmem:[%s808 + $0x69] sm:$0xff]
        %v872 = vld [vmem:[%s808 + $0x79] sm:$0xff]
        %v873 = vld [vmem:[%s808 + $0x81] sm:$0xff]
        %v874 = vld [vmem:[%s808 + $0x91] sm:$0xff]
        %v875 = vld [vmem:[%s808 + $0x99] sm:$0xff]
        %v876 = vld [vmem:[%s808 + $0xa9] sm:$0xff]
        %v877 = vld [vmem:[%s808 + $0xb1] sm:$0xff]
        %v878 = vld [vmem:[%s3 + $0x4] sm:$0x1]
        %v879 = vlaneseq
        %v880 = vshrl.u32 %v879, 7
        %v881 = vsub.s32 0, %v880
        %v882 = vrot.slane %v878, %v881
        %v883 = vmul.f32 %v862, %v882
        %v884 = vmul.f32 %v863, %v882
        %v885 = vmul.f32 %v864, %v882
        %v886 = vmul.f32 %v865, %v882
        %v887 = vmul.f32 %v866, %v882
        %v888 = vmul.f32 %v867, %v882
        %v889 = vmul.f32 %v868, %v882
        %v890 = vmul.f32 %v869, %v882
        %v891 = vmul.f32 %v870, %v882
        %v892 = vmul.f32 %v871, %v882
        %v893 = vmul.f32 %v872, %v882
        %v894 = vmul.f32 %v873, %v882
        %v895 = vmul.f32 %v874, %v882
        %v896 = vmul.f32 %v875, %v882
        %v897 = vmul.f32 %v876, %v882
        %v898 = vmul.f32 %v877, %v882
        %v899 = vadd.f32 %v846, %v883
        %v900 = vadd.f32 %v847, %v884
        %v901 = vadd.f32 %v848, %v885
        %v902 = vadd.f32 %v849, %v886
        %v903 = vadd.f32 %v850, %v887
        %v904 = vadd.f32 %v851, %v888
        %v905 = vadd.f32 %v852, %v889
        %v906 = vadd.f32 %v853, %v890
        %v907 = vadd.f32 %v854, %v891
        %v908 = vadd.f32 %v855, %v892
        %v909 = vadd.f32 %v856, %v893
        %v910 = vadd.f32 %v857, %v894
        %v911 = vadd.f32 %v858, %v895
        %v912 = vadd.f32 %v859, %v896
        %v913 = vadd.f32 %v860, %v897
        %v914 = vadd.f32 %v861, %v898
        %v915 = vld [vmem:[%s808 + $0x2] sm:$0xff]
        %v916 = vld [vmem:[%s808 + $0xa] sm:$0xff]
        %v917 = vld [vmem:[%s808 + $0x1a] sm:$0xff]
        %v918 = vld [vmem:[%s808 + $0x22] sm:$0xff]
        %v919 = vld [vmem:[%s808 + $0x32] sm:$0xff]
        %v920 = vld [vmem:[%s808 + $0x3a] sm:$0xff]
        %v921 = vld [vmem:[%s808 + $0x4a] sm:$0xff]
        %v922 = vld [vmem:[%s808 + $0x52] sm:$0xff]
        %v923 = vld [vmem:[%s808 + $0x62] sm:$0xff]
        %v924 = vld [vmem:[%s808 + $0x6a] sm:$0xff]
        %v925 = vld [vmem:[%s808 + $0x7a] sm:$0xff]
        %v926 = vld [vmem:[%s808 + $0x82] sm:$0xff]
        %v927 = vld [vmem:[%s808 + $0x92] sm:$0xff]
        %v928 = vld [vmem:[%s808 + $0x9a] sm:$0xff]
        %v929 = vld [vmem:[%s808 + $0xaa] sm:$0xff]
        %v930 = vld [vmem:[%s808 + $0xb2] sm:$0xff]
        %v931 = vld [vmem:[%s3 + $0x5] sm:$0x1]
        %v932 = vlaneseq
        %v933 = vshrl.u32 %v932, 7
        %v934 = vsub.s32 0, %v933
        %v935 = vrot.slane %v931, %v934
        %v936 = vmul.f32 %v915, %v935
        %v937 = vmul.f32 %v916, %v935
        %v938 = vmul.f32 %v917, %v935
        %v939 = vmul.f32 %v918, %v935
        %v940 = vmul.f32 %v919, %v935
        %v941 = vmul.f32 %v920, %v935
        %v942 = vmul.f32 %v921, %v935
        %v943 = vmul.f32 %v922, %v935
        %v944 = vmul.f32 %v923, %v935
        %v945 = vmul.f32 %v924, %v935
        %v946 = vmul.f32 %v925, %v935
        %v947 = vmul.f32 %v926, %v935
        %v948 = vmul.f32 %v927, %v935
        %v949 = vmul.f32 %v928, %v935
        %v950 = vmul.f32 %v929, %v935
        %v951 = vmul.f32 %v930, %v935
        %v952 = vadd.f32 %v899, %v936
        %v953 = vadd.f32 %v900, %v937
        %v954 = vadd.f32 %v901, %v938
        %v955 = vadd.f32 %v902, %v939
        %v956 = vadd.f32 %v903, %v940
        %v957 = vadd.f32 %v904, %v941
        %v958 = vadd.f32 %v905, %v942
        %v959 = vadd.f32 %v906, %v943
        %v960 = vadd.f32 %v907, %v944
        %v961 = vadd.f32 %v908, %v945
        %v962 = vadd.f32 %v909, %v946
        %v963 = vadd.f32 %v910, %v947
        %v964 = vadd.f32 %v911, %v948
        %v965 = vadd.f32 %v912, %v949
        %v966 = vadd.f32 %v913, %v950
        %v967 = vadd.f32 %v914, %v951
        %s968 = scalar_lea.vmem [#allocation2], 72
        %v969 = vld [vmem:[%s968] sm:$0xff]
        %v970 = vld [vmem:[%s968 + $0x8] sm:$0xff]
        %v971 = vld [vmem:[%s968 + $0x18] sm:$0xff]
        %v972 = vld [vmem:[%s968 + $0x20] sm:$0xff]
        %v973 = vld [vmem:[%s968 + $0x30] sm:$0xff]
        %v974 = vld [vmem:[%s968 + $0x38] sm:$0xff]
        %v975 = vld [vmem:[%s968 + $0x48] sm:$0xff]
        %v976 = vld [vmem:[%s968 + $0x50] sm:$0xff]
        %v977 = vld [vmem:[%s968 + $0x60] sm:$0xff]
        %v978 = vld [vmem:[%s968 + $0x68] sm:$0xff]
        %v979 = vld [vmem:[%s968 + $0x78] sm:$0xff]
        %v980 = vld [vmem:[%s968 + $0x80] sm:$0xff]
        %v981 = vld [vmem:[%s968 + $0x90] sm:$0xff]
        %v982 = vld [vmem:[%s968 + $0x98] sm:$0xff]
        %v983 = vld [vmem:[%s968 + $0xa8] sm:$0xff]
        %v984 = vld [vmem:[%s968 + $0xb0] sm:$0xff]
        %v985 = vld [vmem:[%s3 + $0x6] sm:$0x1]
        %v986 = vlaneseq
        %v987 = vshrl.u32 %v986, 7
        %v988 = vsub.s32 0, %v987
        %v989 = vrot.slane %v985, %v988
        %v990 = vmul.f32 %v969, %v989
        %v991 = vmul.f32 %v970, %v989
        %v992 = vmul.f32 %v971, %v989
        %v993 = vmul.f32 %v972, %v989
        %v994 = vmul.f32 %v973, %v989
        %v995 = vmul.f32 %v974, %v989
        %v996 = vmul.f32 %v975, %v989
        %v997 = vmul.f32 %v976, %v989
        %v998 = vmul.f32 %v977, %v989
        %v999 = vmul.f32 %v978, %v989
        %v1000 = vmul.f32 %v979, %v989
        %v1001 = vmul.f32 %v980, %v989
        %v1002 = vmul.f32 %v981, %v989
        %v1003 = vmul.f32 %v982, %v989
        %v1004 = vmul.f32 %v983, %v989
        %v1005 = vmul.f32 %v984, %v989
        %v1006 = vadd.f32 %v952, %v990
        %v1007 = vadd.f32 %v953, %v991
        %v1008 = vadd.f32 %v954, %v992
        %v1009 = vadd.f32 %v955, %v993
        %v1010 = vadd.f32 %v956, %v994
        %v1011 = vadd.f32 %v957, %v995
        %v1012 = vadd.f32 %v958, %v996
        %v1013 = vadd.f32 %v959, %v997
        %v1014 = vadd.f32 %v960, %v998
        %v1015 = vadd.f32 %v961, %v999
        %v1016 = vadd.f32 %v962, %v1000
        %v1017 = vadd.f32 %v963, %v1001
        %v1018 = vadd.f32 %v964, %v1002
        %v1019 = vadd.f32 %v965, %v1003
        %v1020 = vadd.f32 %v966, %v1004
        %v1021 = vadd.f32 %v967, %v1005
        %v1022 = vld [vmem:[%s968 + $0x1] sm:$0xff]
        %v1023 = vld [vmem:[%s968 + $0x9] sm:$0xff]
        %v1024 = vld [vmem:[%s968 + $0x19] sm:$0xff]
        %v1025 = vld [vmem:[%s968 + $0x21] sm:$0xff]
        %v1026 = vld [vmem:[%s968 + $0x31] sm:$0xff]
        %v1027 = vld [vmem:[%s968 + $0x39] sm:$0xff]
        %v1028 = vld [vmem:[%s968 + $0x49] sm:$0xff]
        %v1029 = vld [vmem:[%s968 + $0x51] sm:$0xff]
        %v1030 = vld [vmem:[%s968 + $0x61] sm:$0xff]
        %v1031 = vld [vmem:[%s968 + $0x69] sm:$0xff]
        %v1032 = vld [vmem:[%s968 + $0x79] sm:$0xff]
        %v1033 = vld [vmem:[%s968 + $0x81] sm:$0xff]
        %v1034 = vld [vmem:[%s968 + $0x91] sm:$0xff]
        %v1035 = vld [vmem:[%s968 + $0x99] sm:$0xff]
        %v1036 = vld [vmem:[%s968 + $0xa9] sm:$0xff]
        %v1037 = vld [vmem:[%s968 + $0xb1] sm:$0xff]
        %v1038 = vld [vmem:[%s3 + $0x7] sm:$0x1]
        %v1039 = vlaneseq
        %v1040 = vshrl.u32 %v1039, 7
        %v1041 = vsub.s32 0, %v1040
        %v1042 = vrot.slane %v1038, %v1041
        %v1043 = vmul.f32 %v1022, %v1042
        %v1044 = vmul.f32 %v1023, %v1042
        %v1045 = vmul.f32 %v1024, %v1042
        %v1046 = vmul.f32 %v1025, %v1042
        %v1047 = vmul.f32 %v1026, %v1042
        %v1048 = vmul.f32 %v1027, %v1042
        %v1049 = vmul.f32 %v1028, %v1042
        %v1050 = vmul.f32 %v1029, %v1042
        %v1051 = vmul.f32 %v1030, %v1042
        %v1052 = vmul.f32 %v1031, %v1042
        %v1053 = vmul.f32 %v1032, %v1042
        %v1054 = vmul.f32 %v1033, %v1042
        %v1055 = vmul.f32 %v1034, %v1042
        %v1056 = vmul.f32 %v1035, %v1042
        %v1057 = vmul.f32 %v1036, %v1042
        %v1058 = vmul.f32 %v1037, %v1042
        %v1059 = vadd.f32 %v1006, %v1043
        %v1060 = vadd.f32 %v1007, %v1044
        %v1061 = vadd.f32 %v1008, %v1045
        %v1062 = vadd.f32 %v1009, %v1046
        %v1063 = vadd.f32 %v1010, %v1047
        %v1064 = vadd.f32 %v1011, %v1048
        %v1065 = vadd.f32 %v1012, %v1049
        %v1066 = vadd.f32 %v1013, %v1050
        %v1067 = vadd.f32 %v1014, %v1051
        %v1068 = vadd.f32 %v1015, %v1052
        %v1069 = vadd.f32 %v1016, %v1053
        %v1070 = vadd.f32 %v1017, %v1054
        %v1071 = vadd.f32 %v1018, %v1055
        %v1072 = vadd.f32 %v1019, %v1056
        %v1073 = vadd.f32 %v1020, %v1057
        %v1074 = vadd.f32 %v1021, %v1058
        %v1075 = vld [vmem:[%s968 + $0x2] sm:$0xff]
        %v1076 = vld [vmem:[%s968 + $0xa] sm:$0xff]
        %v1077 = vld [vmem:[%s968 + $0x1a] sm:$0xff]
        %v1078 = vld [vmem:[%s968 + $0x22] sm:$0xff]
        %v1079 = vld [vmem:[%s968 + $0x32] sm:$0xff]
        %v1080 = vld [vmem:[%s968 + $0x3a] sm:$0xff]
        %v1081 = vld [vmem:[%s968 + $0x4a] sm:$0xff]
        %v1082 = vld [vmem:[%s968 + $0x52] sm:$0xff]
        %v1083 = vld [vmem:[%s968 + $0x62] sm:$0xff]
        %v1084 = vld [vmem:[%s968 + $0x6a] sm:$0xff]
        %v1085 = vld [vmem:[%s968 + $0x7a] sm:$0xff]
        %v1086 = vld [vmem:[%s968 + $0x82] sm:$0xff]
        %v1087 = vld [vmem:[%s968 + $0x92] sm:$0xff]
        %v1088 = vld [vmem:[%s968 + $0x9a] sm:$0xff]
        %v1089 = vld [vmem:[%s968 + $0xaa] sm:$0xff]
        %v1090 = vld [vmem:[%s968 + $0xb2] sm:$0xff]
        %v1091 = vld [vmem:[%s3 + $0x8] sm:$0x1]
        %v1092 = vlaneseq
        %v1093 = vshrl.u32 %v1092, 7
        %v1094 = vsub.s32 0, %v1093
        %v1095 = vrot.slane %v1091, %v1094
        %v1096 = vmul.f32 %v1075, %v1095
        %v1097 = vmul.f32 %v1076, %v1095
        %v1098 = vmul.f32 %v1077, %v1095
        %v1099 = vmul.f32 %v1078, %v1095
        %v1100 = vmul.f32 %v1079, %v1095
        %v1101 = vmul.f32 %v1080, %v1095
        %v1102 = vmul.f32 %v1081, %v1095
        %v1103 = vmul.f32 %v1082, %v1095
        %v1104 = vmul.f32 %v1083, %v1095
        %v1105 = vmul.f32 %v1084, %v1095
        %v1106 = vmul.f32 %v1085, %v1095
        %v1107 = vmul.f32 %v1086, %v1095
        %v1108 = vmul.f32 %v1087, %v1095
        %v1109 = vmul.f32 %v1088, %v1095
        %v1110 = vmul.f32 %v1089, %v1095
        %v1111 = vmul.f32 %v1090, %v1095
        %v1112 = vadd.f32 %v1059, %v1096
        %v1113 = vadd.f32 %v1060, %v1097
        %v1114 = vadd.f32 %v1061, %v1098
        %v1115 = vadd.f32 %v1062, %v1099
        %v1116 = vadd.f32 %v1063, %v1100
        %v1117 = vadd.f32 %v1064, %v1101
        %v1118 = vadd.f32 %v1065, %v1102
        %v1119 = vadd.f32 %v1066, %v1103
        %v1120 = vadd.f32 %v1067, %v1104
        %v1121 = vadd.f32 %v1068, %v1105
        %v1122 = vadd.f32 %v1069, %v1106
        %v1123 = vadd.f32 %v1070, %v1107
        %v1124 = vadd.f32 %v1071, %v1108
        %v1125 = vadd.f32 %v1072, %v1109
        %v1126 = vadd.f32 %v1073, %v1110
        %v1127 = vadd.f32 %v1074, %v1111
        %v1128 = vld [vmem:[%s4] sm:$0x1]
        %v1130 = vlaneseq
        %v1131 = vshrl.u32 %v1130, 7
        %v1132 = vsub.s32 0, %v1131
        %v1133 = vrot.slane %v1128, %v1132
        %v1135 = vadd.f32 %v1112, %v1133
        %v1136 = vadd.f32 %v1113, %v1133
        %v1137 = vadd.f32 %v1114, %v1133
        %v1138 = vadd.f32 %v1115, %v1133
        %v1139 = vadd.f32 %v1116, %v1133
        %v1140 = vadd.f32 %v1117, %v1133
        %v1141 = vadd.f32 %v1118, %v1133
        %v1142 = vadd.f32 %v1119, %v1133
        %v1143 = vadd.f32 %v1120, %v1133
        %v1144 = vadd.f32 %v1121, %v1133
        %v1145 = vadd.f32 %v1122, %v1133
        %v1146 = vadd.f32 %v1123, %v1133
        %v1147 = vadd.f32 %v1124, %v1133
        %v1148 = vadd.f32 %v1125, %v1133
        %v1149 = vadd.f32 %v1126, %v1133
        %v1150 = vadd.f32 %v1127, %v1133
        %v1151 = vmax.f32 %v1135, 0.0
        %v1152 = vmax.f32 %v1136, 0.0
        %v1153 = vmax.f32 %v1137, 0.0
        %v1154 = vmax.f32 %v1138, 0.0
        %v1155 = vmax.f32 %v1139, 0.0
        %v1156 = vmax.f32 %v1140, 0.0
        %v1157 = vmax.f32 %v1141, 0.0
        %v1158 = vmax.f32 %v1142, 0.0
        %v1159 = vmax.f32 %v1143, 0.0
        %v1160 = vmax.f32 %v1144, 0.0
        %v1161 = vmax.f32 %v1145, 0.0
        %v1162 = vmax.f32 %v1146, 0.0
        %v1163 = vmax.f32 %v1147, 0.0
        %v1164 = vmax.f32 %v1148, 0.0
        %v1165 = vmax.f32 %v1149, 0.0
        %v1166 = vmax.f32 %v1150, 0.0
        %v1167 = vmin.f32 %v1151, 6.0
        %v1168 = vmin.f32 %v1152, 6.0
        %v1169 = vmin.f32 %v1153, 6.0
        %v1170 = vmin.f32 %v1154, 6.0
        %v1171 = vmin.f32 %v1155, 6.0
        %v1172 = vmin.f32 %v1156, 6.0
        %v1173 = vmin.f32 %v1157, 6.0
        %v1174 = vmin.f32 %v1158, 6.0
        %v1175 = vmin.f32 %v1159, 6.0
        %v1176 = vmin.f32 %v1160, 6.0
        %v1177 = vmin.f32 %v1161, 6.0
        %v1178 = vmin.f32 %v1162, 6.0
        %v1179 = vmin.f32 %v1163, 6.0
        %v1180 = vmin.f32 %v1164, 6.0
        %v1181 = vmin.f32 %v1165, 6.0
        %v1182 = vmin.f32 %v1166, 6.0
        %v1183 = vld [vmem:[%s5] sm:$0xff]
        %v1184 = vld [vmem:[%s5 + $0x8] sm:$0xff]
        %v1185 = vld [vmem:[%s5 + $0x10] sm:$0xff]
        %v1186 = vld [vmem:[%s5 + $0x18] sm:$0xff]
        %v1187 = vld [vmem:[%s6] sm:$0x1]
        %v1189 = vlaneseq
        %v1190 = vshrl.u32 %v1189, 7
        %v1191 = vsub.s32 0, %v1190
        %v1192 = vrot.slane %v1187, %v1191
        %v1195 = vsel %vm643, %v1167, 0
        %v1198 = vsel %vm643, %v1168, 0
        %v1201 = vsel %vm643, %v1169, 0
        %v1204 = vsel %vm643, %v1170, 0
        %v1207 = vsel %vm643, %v1171, 0
        %v1210 = vsel %vm643, %v1172, 0
        %v1213 = vsel %vm643, %v1173, 0
        %v1216 = vsel %vm643, %v1174, 0
        %v1219 = vsel %vm643, %v1175, 0
        %v1222 = vsel %vm643, %v1176, 0
        %v1225 = vsel %vm643, %v1177, 0
        %v1228 = vsel %vm643, %v1178, 0
        %v1231 = vsel %vm643, %v1179, 0
        %v1234 = vsel %vm643, %v1180, 0
        %v1237 = vsel %vm643, %v1181, 0
        %v1240 = vsel %vm643, %v1182, 0
        %1242 = vmatprep.subr.mxu0 0.0
        %1243 = vmatpush1.msra.mxu0 0.0
        %1244 = vmatprep.subr.mxu0 0.0
        %1245 = vmatpush1.msra.mxu0 0.0
        %1246 = vmatprep.subr.mxu0 0.0
        %1247 = vmatpush1.msra.mxu0 0.0
        %1248 = vmatprep.subr.mxu0 0.0
        %1249 = vmatpush1.msra.mxu0 0.0
        %1250 = vmatprep.subr.mxu0 0.0
        %1251 = vmatpush1.msra.mxu0 0.0
        %1252 = vmatprep.subr.mxu0 0.0
        %1253 = vmatpush1.msra.mxu0 0.0
        %1254 = vmatprep.subr.mxu0 0.0
        %1255 = vmatpush1.msra.mxu0 0.0
        %1256 = vmatprep.subr.mxu0 0.0
        %1257 = vmatpush1.msra.mxu0 0.0
        %1258 = vmatprep.subr.mxu0 0.0
        %1259 = vmatpush1.msra.mxu0 0.0
        %1260 = vmatprep.subr.mxu0 0.0
        %1261 = vmatpush1.msra.mxu0 0.0
        %1262 = vmatprep.subr.mxu0 0.0
        %1263 = vmatpush1.msra.mxu0 0.0
        %1264 = vmatprep.subr.mxu0 0.0
        %1265 = vmatpush1.msra.mxu0 0.0
        %1266 = vmatprep.subr.mxu0 0.0
        %1267 = vmatpush1.msra.mxu0 %v1186
        %1268 = vmatprep.subr.mxu0 0.0
        %1269 = vmatpush1.msra.mxu0 %v1185
        %1270 = vmatprep.subr.mxu0 0.0
        %1271 = vmatpush1.msra.mxu0 %v1184
        %1272 = vmatprep.subr.mxu0 0.0
        %1273 = vmatpush1.msra.mxu0 %v1183
        %1274 = vmatprep.subr.mxu0 0.0
        %1275 = vmatpush2.msra.mxu0 0.0
        %1276 = vmatprep.subr.mxu0 0.0
        %1277 = vmatpush2.msra.mxu0 0.0
        %1278 = vmatprep.subr.mxu0 0.0
        %1279 = vmatpush2.msra.mxu0 0.0
        %1280 = vmatprep.subr.mxu0 0.0
        %1281 = vmatpush2.msra.mxu0 0.0
        %1282 = vmatprep.subr.mxu0 0.0
        %1283 = vmatpush2.msra.mxu0 0.0
        %1284 = vmatprep.subr.mxu0 0.0
        %1285 = vmatpush2.msra.mxu0 0.0
        %1286 = vmatprep.subr.mxu0 0.0
        %1287 = vmatpush2.msra.mxu0 0.0
        %1288 = vmatprep.subr.mxu0 0.0
        %1289 = vmatpush2.msra.mxu0 0.0
        %1290 = vmatprep.subr.mxu0 0.0
        %1291 = vmatpush2.msra.mxu0 0.0
        %1292 = vmatprep.subr.mxu0 0.0
        %1293 = vmatpush2.msra.mxu0 0.0
        %1294 = vmatprep.subr.mxu0 0.0
        %1295 = vmatpush2.msra.mxu0 0.0
        %1296 = vmatprep.subr.mxu0 0.0
        %1297 = vmatpush2.msra.mxu0 0.0
        %1298 = vmatprep.subr.mxu0 0.0
        %1299 = vmatpush2.msra.mxu0 0.0
        %1300 = vmatprep.subr.mxu0 0.0
        %1301 = vmatpush2.msra.mxu0 0.0
        %1302 = vmatprep.subr.mxu0 0.0
        %1303 = vmatpush2.msra.mxu0 0.0
        %1304 = vmatprep.subr.mxu0 0.0
        %1305 = vmatpush2.msra.mxu0 0.0
        %1306 = vmatprep.mubr.f32.mxu0 0.0
        %1307 = vmatmul.mubr.f32.gmra.mxu0 %v1195
        %v1308 = vpop.f32.mrf.mxu0
        %v1309 = vadd.f32 %v1192, %v1308
        %v1310 = vpop.f32.mrf.mxu0
        %1311 = vmatprep.mubr.f32.mxu0 0.0
        %1312 = vmatmul.mubr.f32.gmra.mxu0 %v1198
        %v1313 = vpop.f32.mrf.mxu0
        %v1314 = vadd.f32 %v1192, %v1313
        %v1315 = vpop.f32.mrf.mxu0
        %1316 = vmatprep.mubr.f32.mxu0 0.0
        %1317 = vmatmul.mubr.f32.gmra.mxu0 %v1201
        %v1318 = vpop.f32.mrf.mxu0
        %v1319 = vadd.f32 %v1192, %v1318
        %v1320 = vpop.f32.mrf.mxu0
        %1321 = vmatprep.mubr.f32.mxu0 0.0
        %1322 = vmatmul.mubr.f32.gmra.mxu0 %v1204
        %v1323 = vpop.f32.mrf.mxu0
        %v1324 = vadd.f32 %v1192, %v1323
        %v1325 = vpop.f32.mrf.mxu0
        %1326 = vmatprep.mubr.f32.mxu0 0.0
        %1327 = vmatmul.mubr.f32.gmra.mxu0 %v1207
        %v1328 = vpop.f32.mrf.mxu0
        %v1329 = vadd.f32 %v1192, %v1328
        %v1330 = vpop.f32.mrf.mxu0
        %1331 = vmatprep.mubr.f32.mxu0 0.0
        %1332 = vmatmul.mubr.f32.gmra.mxu0 %v1210
        %v1333 = vpop.f32.mrf.mxu0
        %v1334 = vadd.f32 %v1192, %v1333
        %v1335 = vpop.f32.mrf.mxu0
        %1336 = vmatprep.mubr.f32.mxu0 0.0
        %1337 = vmatmul.mubr.f32.gmra.mxu0 %v1213
        %v1338 = vpop.f32.mrf.mxu0
        %v1339 = vadd.f32 %v1192, %v1338
        %v1340 = vpop.f32.mrf.mxu0
        %1341 = vmatprep.mubr.f32.mxu0 0.0
        %1342 = vmatmul.mubr.f32.gmra.mxu0 %v1216
        %v1343 = vpop.f32.mrf.mxu0
        %v1344 = vadd.f32 %v1192, %v1343
        %v1345 = vpop.f32.mrf.mxu0
        %1346 = vmatprep.mubr.f32.mxu0 0.0
        %1347 = vmatmul.mubr.f32.gmra.mxu0 %v1219
        %v1348 = vpop.f32.mrf.mxu0
        %v1349 = vadd.f32 %v1192, %v1348
        %v1350 = vpop.f32.mrf.mxu0
        %1351 = vmatprep.mubr.f32.mxu0 0.0
        %1352 = vmatmul.mubr.f32.gmra.mxu0 %v1222
        %v1353 = vpop.f32.mrf.mxu0
        %v1354 = vadd.f32 %v1192, %v1353
        %v1355 = vpop.f32.mrf.mxu0
        %1356 = vmatprep.mubr.f32.mxu0 0.0
        %1357 = vmatmul.mubr.f32.gmra.mxu0 %v1225
        %v1358 = vpop.f32.mrf.mxu0
        %v1359 = vadd.f32 %v1192, %v1358
        %v1360 = vpop.f32.mrf.mxu0
        %1361 = vmatprep.mubr.f32.mxu0 0.0
        %1362 = vmatmul.mubr.f32.gmra.mxu0 %v1228
        %v1363 = vpop.f32.mrf.mxu0
        %v1364 = vadd.f32 %v1192, %v1363
        %v1365 = vpop.f32.mrf.mxu0
        %1366 = vmatprep.mubr.f32.mxu0 0.0
        %1367 = vmatmul.mubr.f32.gmra.mxu0 %v1231
        %v1368 = vpop.f32.mrf.mxu0
        %v1369 = vadd.f32 %v1192, %v1368
        %v1370 = vpop.f32.mrf.mxu0
        %1371 = vmatprep.mubr.f32.mxu0 0.0
        %1372 = vmatmul.mubr.f32.gmra.mxu0 %v1234
        %v1373 = vpop.f32.mrf.mxu0
        %v1374 = vadd.f32 %v1192, %v1373
        %v1375 = vpop.f32.mrf.mxu0
        %1376 = vmatprep.mubr.f32.mxu0 0.0
        %1377 = vmatmul.mubr.f32.gmra.mxu0 %v1237
        %v1378 = vpop.f32.mrf.mxu0
        %v1379 = vadd.f32 %v1192, %v1378
        %v1380 = vpop.f32.mrf.mxu0
        %1381 = vmatprep.mubr.f32.mxu0 0.0
        %1382 = vmatmul.mubr.f32.gmra.mxu0 %v1240
        %v1383 = vpop.f32.mrf.mxu0
        %v1384 = vadd.f32 %v1192, %v1383
        %v1385 = vpop.f32.mrf.mxu0
        %1386 = vdwg.mxu0
        %s1387 = smul.u32 %s26, 128
        %s1388 = scalar_lea.vmem %s290, %s1387
        %v1389 = vld [vmem:[%s1388] sm:$0xff]
        %v1390 = vld [vmem:[%s1388 + $0x8] sm:$0xff]
        %v1391 = vld [vmem:[%s1388 + $0x10] sm:$0xff]
        %v1392 = vld [vmem:[%s1388 + $0x18] sm:$0xff]
        %v1393 = vld [vmem:[%s1388 + $0x20] sm:$0xff]
        %v1394 = vld [vmem:[%s1388 + $0x28] sm:$0xff]
        %v1395 = vld [vmem:[%s1388 + $0x30] sm:$0xff]
        %v1396 = vld [vmem:[%s1388 + $0x38] sm:$0xff]
        %v1397 = vld [vmem:[%s1388 + $0x40] sm:$0xff]
        %v1398 = vld [vmem:[%s1388 + $0x48] sm:$0xff]
        %v1399 = vld [vmem:[%s1388 + $0x50] sm:$0xff]
        %v1400 = vld [vmem:[%s1388 + $0x58] sm:$0xff]
        %v1401 = vld [vmem:[%s1388 + $0x60] sm:$0xff]
        %v1402 = vld [vmem:[%s1388 + $0x68] sm:$0xff]
        %v1403 = vld [vmem:[%s1388 + $0x70] sm:$0xff]
        %v1404 = vld [vmem:[%s1388 + $0x78] sm:$0xff]
        %v1405 = vsel %vm328, %v1389, 0.0
        %v1406 = vsel %vm328, %v1390, 0.0
        %v1407 = vsel %vm328, %v1391, 0.0
        %v1408 = vsel %vm328, %v1392, 0.0
        %v1409 = vsel %vm328, %v1393, 0.0
        %v1410 = vsel %vm328, %v1394, 0.0
        %v1411 = vsel %vm328, %v1395, 0.0
        %v1412 = vsel %vm328, %v1396, 0.0
        %v1413 = vsel %vm328, %v1397, 0.0
        %v1414 = vsel %vm328, %v1398, 0.0
        %v1415 = vsel %vm328, %v1399, 0.0
        %v1416 = vsel %vm328, %v1400, 0.0
        %v1417 = vsel %vm328, %v1401, 0.0
        %v1418 = vsel %vm328, %v1402, 0.0
        %v1419 = vsel %vm328, %v1403, 0.0
        %v1420 = vsel %vm328, %v1404, 0.0
        %v1421 = vadd.f32 %v1309, %v1405
        %v1422 = vadd.f32 %v1314, %v1406
        %v1423 = vadd.f32 %v1319, %v1407
        %v1424 = vadd.f32 %v1324, %v1408
        %v1425 = vadd.f32 %v1329, %v1409
        %v1426 = vadd.f32 %v1334, %v1410
        %v1427 = vadd.f32 %v1339, %v1411
        %v1428 = vadd.f32 %v1344, %v1412
        %v1429 = vadd.f32 %v1349, %v1413
        %v1430 = vadd.f32 %v1354, %v1414
        %v1431 = vadd.f32 %v1359, %v1415
        %v1432 = vadd.f32 %v1364, %v1416
        %v1433 = vadd.f32 %v1369, %v1417
        %v1434 = vadd.f32 %v1374, %v1418
        %v1435 = vadd.f32 %v1379, %v1419
        %v1436 = vadd.f32 %v1384, %v1420
        %1437 = vst [vmem:[%s285] sm:$0xff] %v1421
        %1438 = vst [vmem:[%s285 + $0x8] sm:$0xff] %v1422
        %1439 = vst [vmem:[%s285 + $0x10] sm:$0xff] %v1423
        %1440 = vst [vmem:[%s285 + $0x18] sm:$0xff] %v1424
        %1441 = vst [vmem:[%s285 + $0x20] sm:$0xff] %v1425
        %1442 = vst [vmem:[%s285 + $0x28] sm:$0xff] %v1426
        %1443 = vst [vmem:[%s285 + $0x30] sm:$0xff] %v1427
        %1444 = vst [vmem:[%s285 + $0x38] sm:$0xff] %v1428
        %1445 = vst [vmem:[%s285 + $0x40] sm:$0xff] %v1429
        %1446 = vst [vmem:[%s285 + $0x48] sm:$0xff] %v1430
        %1447 = vst [vmem:[%s285 + $0x50] sm:$0xff] %v1431
        %1448 = vst [vmem:[%s285 + $0x58] sm:$0xff] %v1432
        %1449 = vst [vmem:[%s285 + $0x60] sm:$0xff] %v1433
        %1450 = vst [vmem:[%s285 + $0x68] sm:$0xff] %v1434
        %1451 = vst [vmem:[%s285 + $0x70] sm:$0xff] %v1435
        %1452 = vst [vmem:[%s285 + $0x78] sm:$0xff] %v1436
        %s1453 = sand.u32 %s195, 1
        %s1454 = scalar_lea.sflag [#allocation4], %s1453
        %s1455 = sand.u32 %s195, 1
        %s1456 = smul.addr %s1455, 128
        %s1457 = scalar_lea.vmem [#allocation3], %s1456
        // Predicated region
        $region57: #{tpu_custom_call.1} parent=47 // pred_check
          %p1458 = pneg %p205
        $region58: #{tpu_custom_call.1} parent=47 // pred_check_branch
          %1460 = sbr.rel (%p1458) target = $region60
        $region59: #{tpu_custom_call.1} parent=47 // pred_region
          %s1461 = smul.u32 16, %s26
          %s1463 = ssub.s32 2048, 2048
          %1464 = vsyncadd %s1454, %s1463
          %s1465 = smul.addr %s25, 32
          %s1466 = sadd.s32 %s1461, %s1465
          %s1467 = smul.addr %s1466, 128
          %s1468 = scalar_lea.hbm %s7, %s1467
          %s1469 = sshll.u32 %s1457, 4
          %s1470 = int_to_ptr.vmem [resolvable:$true] %s1469
          %1475 = dma.vmem_to_hbm [thread:$0]  %s1470, 2048, %s1468, %s1454, 128, 128, 8
        $region60: #{tpu_custom_call.1} parent=47 // pred_fallthru
          _
      $region48: #{tpu_custom_call.1} parent=5 // pred_fallthru
        _
      %p1476 = scmp.le.s32.totalorder 2, %s16
      // Predicated region
      $region61: #{tpu_custom_call.1} parent=5 // pred_check
        %p1477 = pneg %p1476
      $region62: #{tpu_custom_call.1} parent=5 // pred_check_branch
        %1479 = sbr.rel (%p1477) target = $region64
      $region63: #{tpu_custom_call.1} parent=5 // pred_region
        %s1480 = ssub.s32 %s16, 2
        // Predicated region
        $region65: #{tpu_custom_call.1} parent=63 // pred_check
          %p1481 = pneg %p211
        $region66: #{tpu_custom_call.1} parent=63 // pred_check_branch
          %1483 = sbr.rel (%p1481) target = $region68
        $region67: #{tpu_custom_call.1} parent=63 // pred_region
          %s1484 = sand.u32 %s196, 1
          %s1485 = scalar_lea.sflag [#allocation4], %s1484
          %s1486 = sand.u32 %s196, 1
          %s1487 = smul.addr %s1486, 128
          %s1488 = scalar_lea.vmem [#allocation3], %s1487
          %1489 = dma.done %s1485, 2048
        $region68: #{tpu_custom_call.1} parent=63 // pred_fallthru
          _
      $region64: #{tpu_custom_call.1} parent=5 // pred_fallthru
        _
    $region6: #{tpu_custom_call.1} parent=1 // loop_footer
      %s20 = sadd.s32 1, %s16
    $region7: #{tpu_custom_call.1} parent=1 // loop_footer_branch
      %15 = sbr.rel target = $region3
    $region8: #{tpu_custom_call.1} parent=1 // loop_exit
      _
    %1490 = vsyncpa [#allocation4], 1
    %s1491 = scalar_lea.sflag [#allocation4], 1
    %1492 = vsyncpa %s1491, 1

</llo_original>
